<compile_context>
chip_gen: v7x
topology: tpu7x:2x2x1
jax: 0.10.0
libtpu: 0.0.40
codegen_flags: <defaults>
</compile_context>

<pallas_src>
import functools

import jax
import jax.numpy as jnp
from jax import lax
from jax.experimental import pallas as pl
from jax.experimental.pallas import tpu as pltpu


def _round_up(x, m):
    return ((x + m - 1) // m) * m


def _lane_pad(n):
    return max(_round_up(n, 128), 128)


def _sub_pad(n):
    return max(_round_up(n, 8), 8)


def fc_encoder_kernel(x_ref,
                      w1_ref, b1_ref,
                      w2_ref, b2_ref,
                      w3_ref, b3_ref,
                      w4_ref, b4_ref,
                      o_ref,
                      *, num_layers, matmul_dtype, act_dtype):
    matmul_dtype = jnp.dtype(matmul_dtype)
    act_dtype = jnp.dtype(act_dtype)

    def to_mm(a):
        return a if a.dtype == matmul_dtype else a.astype(matmul_dtype)

    def linear_act(h, w, b):
        # Matmul-dtype MXU inputs, f32 accumulation; bias add + LeakyReLU in
        # act_dtype (bf16 on v6e/v7x, f32 on v5e).
        y = jnp.dot(to_mm(h), w, preferred_element_type=jnp.float32)
        y = y.astype(act_dtype) + b
        return jnp.maximum(y, 0.01 * y)          # LeakyReLU(0.01)

    h = linear_act(x_ref[...], w1_ref[...], b1_ref[...])   # dim -> 2*hidden
    h = linear_act(h, w2_ref[...], b2_ref[...])            # 2*hidden -> hidden

    # num_layers repetitions of the SAME hidden->hidden linear + LeakyReLU.
    # Hoist the shared weight/bias loads; keep b3 as one (1, hidden) row and
    # let the add broadcast (no batch-wide broadcast slab).
    w3 = w3_ref[...]
    b3 = b3_ref[...]
    if num_layers <= 8:
        for _ in range(num_layers):               # small count: full unroll
            h = linear_act(h, w3, b3)
    else:
        # Keep code size / vreg pressure flat for large layer counts.
        h = lax.fori_loop(0, num_layers,
                          lambda _, hh: linear_act(hh, w3, b3), h, unroll=2)

    # Output head: hidden -> low_dim, stored unpadded (the masked lane store
    # is negligible vs. the saved HBM writeback bytes).
    out = jnp.dot(to_mm(h), w4_ref[...], preferred_element_type=jnp.float32)
    o_ref[...] = (out + b4_ref[...]).astype(o_ref.dtype)


def _device_defaults():
    kind = ""
    try:
        kind = jax.devices()[0].device_kind.lower()
    except Exception:
        pass
    if ("v7" in kind) or ("7x" in kind):
        # 64 MiB physical VMEM (32 MiB scoped default), 2 TensorCores, bf16 VPU.
        return dict(act_dtype=jnp.bfloat16,
                    vmem_budget_bytes=36 * 2**20,
                    vmem_limit_bytes=48 * 2**20,
                    prefer_multi_step=True)
    if "v6" in kind:
        # 128 MiB VMEM, bf16 VPU, single TensorCore.
        return dict(act_dtype=jnp.bfloat16,
                    vmem_budget_bytes=56 * 2**20,
                    vmem_limit_bytes=64 * 2**20,
                    prefer_multi_step=False)
    if "v5" in kind:
        # 128 MiB VMEM, f32-only VPU/EUP, single TensorCore.
        return dict(act_dtype=jnp.float32,
                    vmem_budget_bytes=56 * 2**20,
                    vmem_limit_bytes=64 * 2**20,
                    prefer_multi_step=False)
    # Unknown / older generation: conservative defaults.
    return dict(act_dtype=jnp.float32,
                vmem_budget_bytes=24 * 2**20,
                vmem_limit_bytes=32 * 2**20,
                prefer_multi_step=False)


def _choose_batch_tile(B, dim, hidden_dim, low_dim, *, matmul_dtype, act_dtype,
                       vmem_budget_bytes, prefer_multi_step):
    """Largest batch tile (multiple of 8) fitting the VMEM budget, with a
    generation-aware grid-step policy (1 step on single-TC parts, >=2 even
    steps on v7x so ("parallel",) shards both TensorCores)."""
    mm_b = jnp.dtype(matmul_dtype).itemsize
    act_b = jnp.dtype(act_dtype).itemsize

    # Grid-invariant weights / biases (assume default double-buffering,
    # lane/sublane padded VMEM tiles).
    layer_shapes = [(dim, 2 * hidden_dim), (2 * hidden_dim, hidden_dim),
                    (hidden_dim, hidden_dim), (hidden_dim, low_dim)]
    weight_bytes = 0
    for fi, fo in layer_shapes:
        weight_bytes += 2 * mm_b * _sub_pad(fi) * _lane_pad(fo)   # weight tile
        weight_bytes += 2 * 4 * 8 * _lane_pad(fo)                 # bias tile

    # Per-batch-row live VMEM: x/out blocks (double-buffered, lane-padded)
    # plus in-kernel temporaries (f32 accumulator, activation slabs, casts).
    w_max = _lane_pad(2 * hidden_dim)
    per_row = (2 * 4 * _lane_pad(dim)          # x tiles (f32)
               + 2 * 4 * _lane_pad(low_dim)    # out tiles (f32, lane-padded)
               + 2 * 4 * w_max                 # f32 matmul accumulator slabs
               + 3 * act_b * w_max             # live activations
               + 1 * mm_b * w_max)             # matmul-dtype operand copy
    avail = max(vmem_budget_bytes - weight_bytes, 8 * per_row)
    max_rows = min(8192, max(8, (avail // per_row) // 8 * 8))

    B8 = max(8, _round_up(B, 8))
    if prefer_multi_step and B > 8:
        # v7x: aim for 2 (even) grid steps so the two TensorCores split work.
        target = max(8, _round_up(pl.cdiv(B, 2), 8))
    else:
        # Single TensorCore: one grid step whenever the whole batch fits
        # (nothing to overlap; an extra step only adds per-step overhead).
        target = B8
    return min(target, max_rows)


def fc_encoder_forward(x, params, *, num_layers, batch_tile=None,
                       matmul_dtype=jnp.bfloat16, act_dtype=None,
                       vmem_budget_bytes=None, vmem_limit_bytes=None,
                       single_buffer_weights=False):
    """FCEncoder forward pass with a Pallas TPU kernel.

    x: [B, dim] float32.
    params: dict with w1..w4 stored [in, out] and b1..b4 stored [1, out] (f32).
    fp32 parity: pass matmul_dtype=jnp.float32 (act_dtype then defaults to f32).
    """
    defaults = _device_defaults()
    matmul_dtype = jnp.dtype(matmul_dtype)
    if act_dtype is None:
        act_dtype = (jnp.float32 if matmul_dtype == jnp.dtype(jnp.float32)
                     else defaults["act_dtype"])
    act_dtype = jnp.dtype(act_dtype)
    if vmem_budget_bytes is None:
        vmem_budget_bytes = defaults["vmem_budget_bytes"]
    if vmem_limit_bytes is None:
        vmem_limit_bytes = defaults["vmem_limit_bytes"]

    B, dim = x.shape
    hidden_dim = params["w3"].shape[0]
    low_dim = params["w4"].shape[1]

    # Pre-cast weights once (halves weight DMA + VMEM for bf16); hidden-layer
    # biases live in the elementwise dtype, the output bias stays f32.
    w1 = params["w1"].astype(matmul_dtype); b1 = params["b1"].astype(act_dtype)
    w2 = params["w2"].astype(matmul_dtype); b2 = params["b2"].astype(act_dtype)
    w3 = params["w3"].astype(matmul_dtype); b3 = params["b3"].astype(act_dtype)
    w4 = params["w4"].astype(matmul_dtype); b4 = params["b4"].astype(jnp.float32)

    if batch_tile is None:
        batch_tile = _choose_batch_tile(
            B, dim, hidden_dim, low_dim, matmul_dtype=matmul_dtype,
            act_dtype=act_dtype, vmem_budget_bytes=vmem_budget_bytes,
            prefer_multi_step=defaults["prefer_multi_step"])
    batch_tile = max(8, _round_up(batch_tile, 8))

    # Ragged batch handling: zero-pad rows up to a multiple of batch_tile
    # (padded rows are computed and sliced off afterwards).
    B_pad = _round_up(B, batch_tile)
    if B_pad != B:
        x = jnp.pad(x, ((0, B_pad - B), (0, 0)))

    # Grid-invariant weights/biases: same block every step (fetched once).
    # TODO(synk): on v7x with large hidden_dim, enable single_buffer_weights
    # (pipeline_mode=pl.Buffered(1)) to halve weight VMEM residency.
    weight_kwargs = (dict(pipeline_mode=pl.Buffered(1))
                     if single_buffer_weights else {})

    def rep(arr):
        return pl.BlockSpec(arr.shape, lambda i: (0, 0), **weight_kwargs)

    kernel = functools.partial(fc_encoder_kernel, num_layers=num_layers,
                               matmul_dtype=matmul_dtype, act_dtype=act_dtype)

    out = pl.pallas_call(
        kernel,
        out_shape=jax.ShapeDtypeStruct((B_pad, low_dim), x.dtype),
        grid_spec=pltpu.PrefetchScalarGridSpec(
            num_scalar_prefetch=0,
            grid=(B_pad // batch_tile,),
            in_specs=[
                pl.BlockSpec((batch_tile, dim), lambda i: (i, 0)),  # x tile
                rep(w1), rep(b1),
                rep(w2), rep(b2),
                rep(w3), rep(b3),
                rep(w4), rep(b4),
            ],
            # Unpadded (batch_tile, low_dim) output block: last dim equals the
            # full array extent (legal) -> no 128-lane padded f32 writeback.
            out_specs=pl.BlockSpec((batch_tile, low_dim), lambda i: (i, 0)),
        ),
        compiler_params=pltpu.CompilerParams(
            dimension_semantics=("parallel",),
            vmem_limit_bytes=vmem_limit_bytes),
    )(x, w1, b1, w2, b2, w3, b3, w4, b4)

    return out[:B]


def init_params(key, dim, hidden_dim, low_dim):
    """Deterministic synthetic init (uniform, torch-Linear-like fan_in scaling).

    Weights stored transposed vs. torch: [in_features, out_features].
    Biases stored as [1, out_features] for clean 2D broadcasting on TPU.
    """
    def linear(k, fan_in, fan_out):
        kw, kb = jax.random.split(k)
        bound = 1.0 / jnp.sqrt(fan_in)
        w = jax.random.uniform(kw, (fan_in, fan_out), jnp.float32, -bound, bound)
        b = jax.random.uniform(kb, (1, fan_out), jnp.float32, -bound, bound)
        return w, b

    k1, k2, k3, k4 = jax.random.split(key, 4)
    w1, b1 = linear(k1, dim, hidden_dim * 2)
    w2, b2 = linear(k2, hidden_dim * 2, hidden_dim)
    w3, b3 = linear(k3, hidden_dim, hidden_dim)   # shared across num_layers reps
    w4, b4 = linear(k4, hidden_dim, low_dim)
    return dict(w1=w1, b1=b1, w2=w2, b2=b2, w3=w3, b3=b3, w4=w4, b4=b4)


def reference_forward(x, params, *, num_layers, matmul_dtype=jnp.float32,
                      act_dtype=jnp.float32):
    """Pure-JAX reference mirroring the kernel's dtype choices."""
    matmul_dtype = jnp.dtype(matmul_dtype)
    act_dtype = jnp.dtype(act_dtype)

    def dot(a, w):
        return jnp.dot(a.astype(matmul_dtype), w.astype(matmul_dtype),
                       preferred_element_type=jnp.float32)

    def act(y, b):
        y = y.astype(act_dtype) + b.astype(act_dtype)
        return jnp.maximum(y, 0.01 * y)

    h = act(dot(x, params["w1"]), params["b1"])
    h = act(dot(h, params["w2"]), params["b2"])
    for _ in range(num_layers):
        h = act(dot(h, params["w3"]), params["b3"])
    return (dot(h, params["w4"]) + params["b4"]).astype(jnp.float32)


if __name__ == "__main__":
    key = jax.random.PRNGKey(0)
    kx, kp = jax.random.split(key)

    # Shapes consistent with FCEncoder(dim=16, num_layers=3, hidden_dim=32,
    # low_dim=2, act='lrelu'); B=256 exercises the batch-tiled grid.
    B, dim, hidden_dim, low_dim, num_layers = 256, 16, 32, 2, 3

    x = jax.random.normal(kx, (B, dim), jnp.float32)
    params = init_params(kp, dim, hidden_dim, low_dim)

    act_dtype = _device_defaults()["act_dtype"]

    out = fc_encoder_forward(x, params, num_layers=num_layers,
                             matmul_dtype=jnp.bfloat16)
    out = jax.block_until_ready(out)
    assert out.shape == (B, low_dim)

    # Reference with matching bf16 matmul + generation-matched elementwise dtype.
    ref = reference_forward(x, params, num_layers=num_layers,
                            matmul_dtype=jnp.bfloat16, act_dtype=act_dtype)
    assert jnp.allclose(out, ref, atol=2e-2, rtol=2e-2), "mismatch vs bf16 reference"

    # Sanity-check against the pure-f32 reference (looser bf16 tolerance).
    ref_f32 = reference_forward(x, params, num_layers=num_layers)
    assert jnp.allclose(out, ref_f32, atol=5e-2, rtol=5e-2), "bf16 drift too large"

    # fp32-parity opt-in path (f32 matmuls + f32 elementwise).
    out_f32 = fc_encoder_forward(x, params, num_layers=num_layers,
                                 matmul_dtype=jnp.float32, act_dtype=jnp.float32)
    out_f32 = jax.block_until_ready(out_f32)
    assert jnp.allclose(out_f32, ref_f32, atol=2e-2, rtol=2e-2), "f32 path mismatch"

    print("KERNEL_OK")
</pallas_src>

<mosaic_0001>
module attributes {stable_mosaic.version = 11 : i64} {
  func.func @fc_encoder_kernel(%arg0: i32, %arg1: memref<256x16xf32, #tpu.memory_space<vmem>>, %arg2: memref<16x64xbf16, #tpu.memory_space<vmem>>, %arg3: memref<1x64xf32, #tpu.memory_space<vmem>>, %arg4: memref<64x32xbf16, #tpu.memory_space<vmem>>, %arg5: memref<1x32xf32, #tpu.memory_space<vmem>>, %arg6: memref<32x32xbf16, #tpu.memory_space<vmem>>, %arg7: memref<1x32xf32, #tpu.memory_space<vmem>>, %arg8: memref<32x2xbf16, #tpu.memory_space<vmem>>, %arg9: memref<1x2xf32, #tpu.memory_space<vmem>>, %arg10: memref<256x2xf32, #tpu.memory_space<vmem>>) attributes {dimension_semantics = [#tpu.dimension_semantics<parallel>], iteration_bounds = array<i64: 1>, scalar_prefetch = 0 : i64, scratch_operands = 0 : i64, tpu.core_type = #tpu.core_type<tc>, window_params = [{transform_indices = @transform_0, window_bounds = array<i64: 256, 16>}, {pipeline_mode = #tpu.pipeline_mode<synchronous>, transform_indices = @transform_1, window_bounds = array<i64: 16, 64>}, {pipeline_mode = #tpu.pipeline_mode<synchronous>, transform_indices = @transform_2, window_bounds = array<i64: 1, 64>}, {pipeline_mode = #tpu.pipeline_mode<synchronous>, transform_indices = @transform_3, window_bounds = array<i64: 64, 32>}, {pipeline_mode = #tpu.pipeline_mode<synchronous>, transform_indices = @transform_4, window_bounds = array<i64: 1, 32>}, {pipeline_mode = #tpu.pipeline_mode<synchronous>, transform_indices = @transform_5, window_bounds = array<i64: 32, 32>}, {pipeline_mode = #tpu.pipeline_mode<synchronous>, transform_indices = @transform_6, window_bounds = array<i64: 1, 32>}, {pipeline_mode = #tpu.pipeline_mode<synchronous>, transform_indices = @transform_7, window_bounds = array<i64: 32, 2>}, {pipeline_mode = #tpu.pipeline_mode<synchronous>, transform_indices = @transform_8, window_bounds = array<i64: 1, 2>}, {transform_indices = @transform_9, window_bounds = array<i64: 256, 2>}]} {
    %c0 = arith.constant 0 : index
    %c0_0 = arith.constant 0 : index
    %0 = vector.load %arg1[%c0, %c0_0] : memref<256x16xf32, #tpu.memory_space<vmem>>, vector<256x16xf32>
    %c0_1 = arith.constant 0 : index
    %c0_2 = arith.constant 0 : index
    %1 = vector.load %arg2[%c0_1, %c0_2] : memref<16x64xbf16, #tpu.memory_space<vmem>>, vector<16x64xbf16>
    %c0_3 = arith.constant 0 : index
    %c0_4 = arith.constant 0 : index
    %2 = vector.load %arg3[%c0_3, %c0_4] : memref<1x64xf32, #tpu.memory_space<vmem>>, vector<1x64xf32>
    %3 = arith.truncf %0 : vector<256x16xf32> to vector<256x16xbf16>
    %cst = arith.constant dense<0.000000e+00> : vector<256x64xf32>
    %4 = tpu.matmul %3, %1, %cst {dimension_numbers = #tpu.dot_dimension_numbers<[1], [0], [0], [1], [0, 0, 1, 1], [], []>} : vector<256x16xbf16>, vector<16x64xbf16>, vector<256x64xf32> -> vector<256x64xf32>
    %5 = vector.broadcast %2 : vector<1x64xf32> to vector<256x64xf32>
    %6 = arith.addf %4, %5 : vector<256x64xf32>
    %cst_5 = arith.constant 0.00999999977 : f32
    %7 = vector.broadcast %cst_5 : f32 to vector<256x64xf32>
    %8 = arith.mulf %7, %6 : vector<256x64xf32>
    %9 = arith.maximumf %6, %8 : vector<256x64xf32>
    %c0_6 = arith.constant 0 : index
    %c0_7 = arith.constant 0 : index
    %10 = vector.load %arg4[%c0_6, %c0_7] : memref<64x32xbf16, #tpu.memory_space<vmem>>, vector<64x32xbf16>
    %c0_8 = arith.constant 0 : index
    %c0_9 = arith.constant 0 : index
    %11 = vector.load %arg5[%c0_8, %c0_9] : memref<1x32xf32, #tpu.memory_space<vmem>>, vector<1x32xf32>
    %12 = arith.truncf %9 : vector<256x64xf32> to vector<256x64xbf16>
    %cst_10 = arith.constant dense<0.000000e+00> : vector<256x32xf32>
    %13 = tpu.matmul %12, %10, %cst_10 {dimension_numbers = #tpu.dot_dimension_numbers<[1], [0], [0], [1], [0, 0, 1, 1], [], []>} : vector<256x64xbf16>, vector<64x32xbf16>, vector<256x32xf32> -> vector<256x32xf32>
    %14 = vector.broadcast %11 : vector<1x32xf32> to vector<256x32xf32>
    %15 = arith.addf %13, %14 : vector<256x32xf32>
    %cst_11 = arith.constant 0.00999999977 : f32
    %16 = vector.broadcast %cst_11 : f32 to vector<256x32xf32>
    %17 = arith.mulf %16, %15 : vector<256x32xf32>
    %18 = arith.maximumf %15, %17 : vector<256x32xf32>
    %c0_12 = arith.constant 0 : index
    %c0_13 = arith.constant 0 : index
    %19 = vector.load %arg6[%c0_12, %c0_13] : memref<32x32xbf16, #tpu.memory_space<vmem>>, vector<32x32xbf16>
    %c0_14 = arith.constant 0 : index
    %c0_15 = arith.constant 0 : index
    %20 = vector.load %arg7[%c0_14, %c0_15] : memref<1x32xf32, #tpu.memory_space<vmem>>, vector<1x32xf32>
    %21 = arith.truncf %18 : vector<256x32xf32> to vector<256x32xbf16>
    %cst_16 = arith.constant dense<0.000000e+00> : vector<256x32xf32>
    %22 = tpu.matmul %21, %19, %cst_16 {dimension_numbers = #tpu.dot_dimension_numbers<[1], [0], [0], [1], [0, 0, 1, 1], [], []>} : vector<256x32xbf16>, vector<32x32xbf16>, vector<256x32xf32> -> vector<256x32xf32>
    %23 = vector.broadcast %20 : vector<1x32xf32> to vector<256x32xf32>
    %24 = arith.addf %22, %23 : vector<256x32xf32>
    %cst_17 = arith.constant 0.00999999977 : f32
    %25 = vector.broadcast %cst_17 : f32 to vector<256x32xf32>
    %26 = arith.mulf %25, %24 : vector<256x32xf32>
    %27 = arith.maximumf %24, %26 : vector<256x32xf32>
    %28 = arith.truncf %27 : vector<256x32xf32> to vector<256x32xbf16>
    %cst_18 = arith.constant dense<0.000000e+00> : vector<256x32xf32>
    %29 = tpu.matmul %28, %19, %cst_18 {dimension_numbers = #tpu.dot_dimension_numbers<[1], [0], [0], [1], [0, 0, 1, 1], [], []>} : vector<256x32xbf16>, vector<32x32xbf16>, vector<256x32xf32> -> vector<256x32xf32>
    %30 = vector.broadcast %20 : vector<1x32xf32> to vector<256x32xf32>
    %31 = arith.addf %29, %30 : vector<256x32xf32>
    %cst_19 = arith.constant 0.00999999977 : f32
    %32 = vector.broadcast %cst_19 : f32 to vector<256x32xf32>
    %33 = arith.mulf %32, %31 : vector<256x32xf32>
    %34 = arith.maximumf %31, %33 : vector<256x32xf32>
    %35 = arith.truncf %34 : vector<256x32xf32> to vector<256x32xbf16>
    %cst_20 = arith.constant dense<0.000000e+00> : vector<256x32xf32>
    %36 = tpu.matmul %35, %19, %cst_20 {dimension_numbers = #tpu.dot_dimension_numbers<[1], [0], [0], [1], [0, 0, 1, 1], [], []>} : vector<256x32xbf16>, vector<32x32xbf16>, vector<256x32xf32> -> vector<256x32xf32>
    %37 = vector.broadcast %20 : vector<1x32xf32> to vector<256x32xf32>
    %38 = arith.addf %36, %37 : vector<256x32xf32>
    %cst_21 = arith.constant 0.00999999977 : f32
    %39 = vector.broadcast %cst_21 : f32 to vector<256x32xf32>
    %40 = arith.mulf %39, %38 : vector<256x32xf32>
    %41 = arith.maximumf %38, %40 : vector<256x32xf32>
    %42 = arith.truncf %41 : vector<256x32xf32> to vector<256x32xbf16>
    %c0_22 = arith.constant 0 : index
    %c0_23 = arith.constant 0 : index
    %43 = vector.load %arg8[%c0_22, %c0_23] : memref<32x2xbf16, #tpu.memory_space<vmem>>, vector<32x2xbf16>
    %cst_24 = arith.constant dense<0.000000e+00> : vector<256x2xf32>
    %44 = tpu.matmul %42, %43, %cst_24 {dimension_numbers = #tpu.dot_dimension_numbers<[1], [0], [0], [1], [0, 0, 1, 1], [], []>} : vector<256x32xbf16>, vector<32x2xbf16>, vector<256x2xf32> -> vector<256x2xf32>
    %c0_25 = arith.constant 0 : index
    %c0_26 = arith.constant 0 : index
    %45 = vector.load %arg9[%c0_25, %c0_26] : memref<1x2xf32, #tpu.memory_space<vmem>>, vector<1x2xf32>
    %46 = vector.broadcast %45 : vector<1x2xf32> to vector<256x2xf32>
    %47 = arith.addf %44, %46 : vector<256x2xf32>
    %c0_27 = arith.constant 0 : index
    %c0_28 = arith.constant 0 : index
    %48 = vector.load %arg10[%c0_27, %c0_28] : memref<256x2xf32, #tpu.memory_space<vmem>>, vector<256x2xf32>
    tpu.vector_store %arg10[%c0_27, %c0_28], %47 {strides = array<i32>} : memref<256x2xf32, #tpu.memory_space<vmem>>, vector<256x2xf32>,
    return
  }
  func.func @transform_0(%arg0: i32) -> (i32, i32) {
    %c0_i32 = arith.constant 0 : i32
    %c0_i32_0 = arith.constant 0 : i32
    return %arg0, %c0_i32 : i32, i32
  }
  func.func @transform_1(%arg0: i32) -> (i32, i32) {
    %c0_i32 = arith.constant 0 : i32
    %c0_i32_0 = arith.constant 0 : i32
    %c0_i32_1 = arith.constant 0 : i32
    return %c0_i32, %c0_i32_0 : i32, i32
  }
  func.func @transform_2(%arg0: i32) -> (i32, i32) {
    %c0_i32 = arith.constant 0 : i32
    %c0_i32_0 = arith.constant 0 : i32
    %c0_i32_1 = arith.constant 0 : i32
    return %c0_i32, %c0_i32_0 : i32, i32
  }
  func.func @transform_3(%arg0: i32) -> (i32, i32) {
    %c0_i32 = arith.constant 0 : i32
    %c0_i32_0 = arith.constant 0 : i32
    %c0_i32_1 = arith.constant 0 : i32
    return %c0_i32, %c0_i32_0 : i32, i32
  }
  func.func @transform_4(%arg0: i32) -> (i32, i32) {
    %c0_i32 = arith.constant 0 : i32
    %c0_i32_0 = arith.constant 0 : i32
    %c0_i32_1 = arith.constant 0 : i32
    return %c0_i32, %c0_i32_0 : i32, i32
  }
  func.func @transform_5(%arg0: i32) -> (i32, i32) {
    %c0_i32 = arith.constant 0 : i32
    %c0_i32_0 = arith.constant 0 : i32
    %c0_i32_1 = arith.constant 0 : i32
    return %c0_i32, %c0_i32_0 : i32, i32
  }
  func.func @transform_6(%arg0: i32) -> (i32, i32) {
    %c0_i32 = arith.constant 0 : i32
    %c0_i32_0 = arith.constant 0 : i32
    %c0_i32_1 = arith.constant 0 : i32
    return %c0_i32, %c0_i32_0 : i32, i32
  }
  func.func @transform_7(%arg0: i32) -> (i32, i32) {
    %c0_i32 = arith.constant 0 : i32
    %c0_i32_0 = arith.constant 0 : i32
    %c0_i32_1 = arith.constant 0 : i32
    return %c0_i32, %c0_i32_0 : i32, i32
  }
  func.func @transform_8(%arg0: i32) -> (i32, i32) {
    %c0_i32 = arith.constant 0 : i32
    %c0_i32_0 = arith.constant 0 : i32
    %c0_i32_1 = arith.constant 0 : i32
    return %c0_i32, %c0_i32_0 : i32, i32
  }
  func.func @transform_9(%arg0: i32) -> (i32, i32) {
    %c0_i32 = arith.constant 0 : i32
    %c0_i32_0 = arith.constant 0 : i32
    return %arg0, %c0_i32 : i32, i32
  }
}

</mosaic_0001>

<llo_original>
// kernel: tpu_custom_call.1
$region0: #{tpu_custom_call.1}
  #allocation0 [shape = 'u32[]', space=smem, size = 0x4, offset = 0x4, fixed_abs, tag = 'smem constant byte address 0x4 - core index']
  #allocation1 [shape = 'u32[144,128]{1,0:T(1,128)}', space=vmem, size = 0x12000, scoped, tag = 'internal scratch']
  %s0 = inlined_call_operand.vmem [shape: f32[256,16], index: 0, kind: input, shape index: {}]
  %s1 = inlined_call_operand.vmem [shape: bf16[16,64], index: 1, kind: input, shape index: {}]
  %s2 = inlined_call_operand.vmem [shape: f32[1,64], index: 2, kind: input, shape index: {}]
  %s3 = inlined_call_operand.vmem [shape: bf16[64,32], index: 3, kind: input, shape index: {}]
  %s4 = inlined_call_operand.vmem [shape: f32[1,32], index: 4, kind: input, shape index: {}]
  %s5 = inlined_call_operand.vmem [shape: bf16[32,32], index: 5, kind: input, shape index: {}]
  %s6 = inlined_call_operand.vmem [shape: f32[1,32], index: 6, kind: input, shape index: {}]
  %s7 = inlined_call_operand.vmem [shape: bf16[32,2], index: 7, kind: input, shape index: {}]
  %s8 = inlined_call_operand.vmem [shape: f32[1,2], index: 8, kind: input, shape index: {}]
  %s9 = inlined_call_operand.vmem [shape: f32[256,2], index: 9, kind: output, shape index: {}]
  %s10 = sld [smem:[#allocation0]]
  $region46: #{tpu_custom_call.1} parent=0
    _
  %s12 = ssub.s32 1, %s10
  %s13 = scalar_select 0, %s12, %s10
  // Predicated region
  $region2: #{tpu_custom_call.1} parent=0 // pred_check
    _
  $region3: #{tpu_custom_call.1} parent=0 // pred_check_branch
    %15 = sbr.rel (0) target = $region5
  $region4: #{tpu_custom_call.1} parent=0 // pred_region
    _
  $region5: #{tpu_custom_call.1} parent=0 // pred_fallthru
    _
  // Predicated region
  $region6: #{tpu_custom_call.1} parent=0 // pred_check
    _
  $region7: #{tpu_custom_call.1} parent=0 // pred_check_branch
    %17 = sbr.rel (0) target = $region9
  $region8: #{tpu_custom_call.1} parent=0 // pred_region
    _
  $region9: #{tpu_custom_call.1} parent=0 // pred_fallthru
    _
  // Predicated region
  $region10: #{tpu_custom_call.1} parent=0 // pred_check
    _
  $region11: #{tpu_custom_call.1} parent=0 // pred_check_branch
    %19 = sbr.rel (0) target = $region13
  $region12: #{tpu_custom_call.1} parent=0 // pred_region
    _
  $region13: #{tpu_custom_call.1} parent=0 // pred_fallthru
    _
  // Predicated region
  $region14: #{tpu_custom_call.1} parent=0 // pred_check
    _
  $region15: #{tpu_custom_call.1} parent=0 // pred_check_branch
    %21 = sbr.rel (0) target = $region17
  $region16: #{tpu_custom_call.1} parent=0 // pred_region
    _
  $region17: #{tpu_custom_call.1} parent=0 // pred_fallthru
    _
  // Predicated region
  $region18: #{tpu_custom_call.1} parent=0 // pred_check
    _
  $region19: #{tpu_custom_call.1} parent=0 // pred_check_branch
    %23 = sbr.rel (0) target = $region21
  $region20: #{tpu_custom_call.1} parent=0 // pred_region
    _
  $region21: #{tpu_custom_call.1} parent=0 // pred_fallthru
    _
  // Predicated region
  $region22: #{tpu_custom_call.1} parent=0 // pred_check
    _
  $region23: #{tpu_custom_call.1} parent=0 // pred_check_branch
    %25 = sbr.rel (0) target = $region25
  $region24: #{tpu_custom_call.1} parent=0 // pred_region
    _
  $region25: #{tpu_custom_call.1} parent=0 // pred_fallthru
    _
  // Predicated region
  $region26: #{tpu_custom_call.1} parent=0 // pred_check
    _
  $region27: #{tpu_custom_call.1} parent=0 // pred_check_branch
    %27 = sbr.rel (0) target = $region29
  $region28: #{tpu_custom_call.1} parent=0 // pred_region
    _
  $region29: #{tpu_custom_call.1} parent=0 // pred_fallthru
    _
  // Predicated region
  $region30: #{tpu_custom_call.1} parent=0 // pred_check
    _
  $region31: #{tpu_custom_call.1} parent=0 // pred_check_branch
    %29 = sbr.rel (0) target = $region33
  $region32: #{tpu_custom_call.1} parent=0 // pred_region
    _
  $region33: #{tpu_custom_call.1} parent=0 // pred_fallthru
    _
  // Predicated region
  $region34: #{tpu_custom_call.1} parent=0 // pred_check
    _
  $region35: #{tpu_custom_call.1} parent=0 // pred_check_branch
    %31 = sbr.rel (0) target = $region37
  $region36: #{tpu_custom_call.1} parent=0 // pred_region
    _
  $region37: #{tpu_custom_call.1} parent=0 // pred_fallthru
    _
  %v33 = vld [vmem:[%s0] sm:$0xff]
  %v34 = vld [vmem:[%s0 + $0x8] sm:$0xff]
  %v35 = vld [vmem:[%s0 + $0x10] sm:$0xff]
  %v36 = vld [vmem:[%s0 + $0x18] sm:$0xff]
  %v37 = vld [vmem:[%s0 + $0x20] sm:$0xff]
  %v38 = vld [vmem:[%s0 + $0x28] sm:$0xff]
  %v39 = vld [vmem:[%s0 + $0x30] sm:$0xff]
  %v40 = vld [vmem:[%s0 + $0x38] sm:$0xff]
  %v41 = vld [vmem:[%s0 + $0x40] sm:$0xff]
  %v42 = vld [vmem:[%s0 + $0x48] sm:$0xff]
  %v43 = vld [vmem:[%s0 + $0x50] sm:$0xff]
  %v44 = vld [vmem:[%s0 + $0x58] sm:$0xff]
  %v45 = vld [vmem:[%s0 + $0x60] sm:$0xff]
  %v46 = vld [vmem:[%s0 + $0x68] sm:$0xff]
  %v47 = vld [vmem:[%s0 + $0x70] sm:$0xff]
  %v48 = vld [vmem:[%s0 + $0x78] sm:$0xff]
  %v49 = vld [vmem:[%s0 + $0x80] sm:$0xff]
  %v50 = vld [vmem:[%s0 + $0x88] sm:$0xff]
  %v51 = vld [vmem:[%s0 + $0x90] sm:$0xff]
  %v52 = vld [vmem:[%s0 + $0x98] sm:$0xff]
  %v53 = vld [vmem:[%s0 + $0xa0] sm:$0xff]
  %v54 = vld [vmem:[%s0 + $0xa8] sm:$0xff]
  %v55 = vld [vmem:[%s0 + $0xb0] sm:$0xff]
  %v56 = vld [vmem:[%s0 + $0xb8] sm:$0xff]
  %v57 = vld [vmem:[%s0 + $0xc0] sm:$0xff]
  %v58 = vld [vmem:[%s0 + $0xc8] sm:$0xff]
  %v59 = vld [vmem:[%s0 + $0xd0] sm:$0xff]
  %v60 = vld [vmem:[%s0 + $0xd8] sm:$0xff]
  %v61 = vld [vmem:[%s0 + $0xe0] sm:$0xff]
  %v62 = vld [vmem:[%s0 + $0xe8] sm:$0xff]
  %v63 = vld [vmem:[%s0 + $0xf0] sm:$0xff]
  %v64 = vld [vmem:[%s0 + $0xf8] sm:$0xff]
  %v65 = vld [vmem:[%s1] sm:$0xf]
  %v66 = vld [vmem:[%s1 + $0x4] sm:$0xf]
  %v67 = vld [vmem:[%s2] sm:$0x1]
  %v68 = vpack.c.bf16 %v34, %v33
  %v69 = vpack.c.bf16 %v36, %v35
  %v70 = vpack.c.bf16 %v38, %v37
  %v71 = vpack.c.bf16 %v40, %v39
  %v72 = vpack.c.bf16 %v42, %v41
  %v73 = vpack.c.bf16 %v44, %v43
  %v74 = vpack.c.bf16 %v46, %v45
  %v75 = vpack.c.bf16 %v48, %v47
  %v76 = vpack.c.bf16 %v50, %v49
  %v77 = vpack.c.bf16 %v52, %v51
  %v78 = vpack.c.bf16 %v54, %v53
  %v79 = vpack.c.bf16 %v56, %v55
  %v80 = vpack.c.bf16 %v58, %v57
  %v81 = vpack.c.bf16 %v60, %v59
  %v82 = vpack.c.bf16 %v62, %v61
  %v83 = vpack.c.bf16 %v64, %v63
  %v85 = vlaneseq
  %v86 = vshrl.u32 %v85, 7
  %v87 = vsub.s32 0, %v86
  %v88 = vrot.slane %v67, %v87
  %v92 = vunpack.c.l.b16 %v65
  %v93 = vunpack.c.l.b16 %v66
  %v94 = vpack.c.b16 %v93, %v92
  %vm96 = vcmask 130048
  %v98 = vsel %vm96, %v68, 0
  %v101 = vsel %vm96, %v69, 0
  %v104 = vsel %vm96, %v70, 0
  %v107 = vsel %vm96, %v71, 0
  %v110 = vsel %vm96, %v72, 0
  %v113 = vsel %vm96, %v73, 0
  %v116 = vsel %vm96, %v74, 0
  %v119 = vsel %vm96, %v75, 0
  %v122 = vsel %vm96, %v76, 0
  %v125 = vsel %vm96, %v77, 0
  %v128 = vsel %vm96, %v78, 0
  %v131 = vsel %vm96, %v79, 0
  %v134 = vsel %vm96, %v80, 0
  %v137 = vsel %vm96, %v81, 0
  %v140 = vsel %vm96, %v82, 0
  %v143 = vsel %vm96, %v83, 0
  %145 = vmatprep.subr.bf16.mxu0 0
  %146 = vmatpush1.bf16.msra.mxu0 %v94
  %147 = vmatprep.subr.bf16.mxu0 0
  %148 = vmatpush1.bf16.msra.mxu0 0
  %149 = vmatprep.subr.bf16.mxu0 0
  %150 = vmatpush1.bf16.msra.mxu0 0
  %151 = vmatprep.subr.bf16.mxu0 0
  %152 = vmatpush1.bf16.msra.mxu0 0
  %153 = vmatprep.subr.bf16.mxu0 0
  %154 = vmatpush1.bf16.msra.mxu0 0
  %155 = vmatprep.subr.bf16.mxu0 0
  %156 = vmatpush1.bf16.msra.mxu0 0
  %157 = vmatprep.subr.bf16.mxu0 0
  %158 = vmatpush1.bf16.msra.mxu0 0
  %159 = vmatprep.subr.bf16.mxu0 0
  %160 = vmatpush1.bf16.msra.mxu0 0
  %161 = vmatprep.subr.bf16.mxu0 0
  %162 = vmatpush1.bf16.msra.mxu0 0
  %163 = vmatprep.subr.bf16.mxu0 0
  %164 = vmatpush1.bf16.msra.mxu0 0
  %165 = vmatprep.subr.bf16.mxu0 0
  %166 = vmatpush1.bf16.msra.mxu0 0
  %167 = vmatprep.subr.bf16.mxu0 0
  %168 = vmatpush1.bf16.msra.mxu0 0
  %169 = vmatprep.subr.bf16.mxu0 0
  %170 = vmatpush1.bf16.msra.mxu0 0
  %171 = vmatprep.subr.bf16.mxu0 0
  %172 = vmatpush1.bf16.msra.mxu0 0
  %173 = vmatprep.subr.bf16.mxu0 0
  %174 = vmatpush1.bf16.msra.mxu0 0
  %175 = vmatprep.subr.bf16.mxu0 0
  %176 = vmatpush1.bf16.msra.mxu0 0
  %177 = vmatprep.mubr.bf16.mxu0 0
  %178 = vmatmul.mubr.bf16.gmra.mrb[0].mxu0 %v98
  %v179 = vpop.f32.mrb[0].mxu0
  %v180 = vadd.f32 %v88, %v179
  %v181 = vpop.f32.mrb[0].mxu0
  %v182 = vpop.f32.mrb[0].mxu0
  %v183 = vadd.f32 %v88, %v182
  %v184 = vpop.f32.mrb[0].mxu0
  %185 = vmatprep.mubr.bf16.mxu0 0
  %186 = vmatmul.mubr.bf16.gmra.mrb[0].mxu0 %v101
  %v187 = vpop.f32.mrb[0].mxu0
  %v188 = vadd.f32 %v88, %v187
  %v189 = vpop.f32.mrb[0].mxu0
  %v190 = vpop.f32.mrb[0].mxu0
  %v191 = vadd.f32 %v88, %v190
  %v192 = vpop.f32.mrb[0].mxu0
  %193 = vmatprep.mubr.bf16.mxu0 0
  %194 = vmatmul.mubr.bf16.gmra.mrb[0].mxu0 %v104
  %v195 = vpop.f32.mrb[0].mxu0
  %v196 = vadd.f32 %v88, %v195
  %v197 = vpop.f32.mrb[0].mxu0
  %v198 = vpop.f32.mrb[0].mxu0
  %v199 = vadd.f32 %v88, %v198
  %v200 = vpop.f32.mrb[0].mxu0
  %201 = vmatprep.mubr.bf16.mxu0 0
  %202 = vmatmul.mubr.bf16.gmra.mrb[0].mxu0 %v107
  %v203 = vpop.f32.mrb[0].mxu0
  %v204 = vadd.f32 %v88, %v203
  %v205 = vpop.f32.mrb[0].mxu0
  %v206 = vpop.f32.mrb[0].mxu0
  %v207 = vadd.f32 %v88, %v206
  %v208 = vpop.f32.mrb[0].mxu0
  %209 = vmatprep.mubr.bf16.mxu0 0
  %210 = vmatmul.mubr.bf16.gmra.mrb[0].mxu0 %v110
  %v211 = vpop.f32.mrb[0].mxu0
  %v212 = vadd.f32 %v88, %v211
  %v213 = vpop.f32.mrb[0].mxu0
  %v214 = vpop.f32.mrb[0].mxu0
  %v215 = vadd.f32 %v88, %v214
  %v216 = vpop.f32.mrb[0].mxu0
  %217 = vmatprep.mubr.bf16.mxu0 0
  %218 = vmatmul.mubr.bf16.gmra.mrb[0].mxu0 %v113
  %v219 = vpop.f32.mrb[0].mxu0
  %v220 = vadd.f32 %v88, %v219
  %v221 = vpop.f32.mrb[0].mxu0
  %v222 = vpop.f32.mrb[0].mxu0
  %v223 = vadd.f32 %v88, %v222
  %v224 = vpop.f32.mrb[0].mxu0
  %225 = vmatprep.mubr.bf16.mxu0 0
  %226 = vmatmul.mubr.bf16.gmra.mrb[0].mxu0 %v116
  %v227 = vpop.f32.mrb[0].mxu0
  %v228 = vadd.f32 %v88, %v227
  %v229 = vpop.f32.mrb[0].mxu0
  %v230 = vpop.f32.mrb[0].mxu0
  %v231 = vadd.f32 %v88, %v230
  %v232 = vpop.f32.mrb[0].mxu0
  %233 = vmatprep.mubr.bf16.mxu0 0
  %234 = vmatmul.mubr.bf16.gmra.mrb[0].mxu0 %v119
  %v235 = vpop.f32.mrb[0].mxu0
  %v236 = vadd.f32 %v88, %v235
  %v237 = vpop.f32.mrb[0].mxu0
  %v238 = vpop.f32.mrb[0].mxu0
  %v239 = vadd.f32 %v88, %v238
  %v240 = vpop.f32.mrb[0].mxu0
  %241 = vmatprep.mubr.bf16.mxu0 0
  %242 = vmatmul.mubr.bf16.gmra.mrb[0].mxu0 %v122
  %v243 = vpop.f32.mrb[0].mxu0
  %v244 = vadd.f32 %v88, %v243
  %v245 = vpop.f32.mrb[0].mxu0
  %v246 = vpop.f32.mrb[0].mxu0
  %v247 = vadd.f32 %v88, %v246
  %v248 = vpop.f32.mrb[0].mxu0
  %249 = vmatprep.mubr.bf16.mxu0 0
  %250 = vmatmul.mubr.bf16.gmra.mrb[0].mxu0 %v125
  %v251 = vpop.f32.mrb[0].mxu0
  %v252 = vadd.f32 %v88, %v251
  %v253 = vpop.f32.mrb[0].mxu0
  %v254 = vpop.f32.mrb[0].mxu0
  %v255 = vadd.f32 %v88, %v254
  %v256 = vpop.f32.mrb[0].mxu0
  %257 = vmatprep.mubr.bf16.mxu0 0
  %258 = vmatmul.mubr.bf16.gmra.mrb[0].mxu0 %v128
  %v259 = vpop.f32.mrb[0].mxu0
  %v260 = vadd.f32 %v88, %v259
  %v261 = vpop.f32.mrb[0].mxu0
  %v262 = vpop.f32.mrb[0].mxu0
  %v263 = vadd.f32 %v88, %v262
  %v264 = vpop.f32.mrb[0].mxu0
  %265 = vmatprep.mubr.bf16.mxu0 0
  %266 = vmatmul.mubr.bf16.gmra.mrb[0].mxu0 %v131
  %v267 = vpop.f32.mrb[0].mxu0
  %v268 = vadd.f32 %v88, %v267
  %v269 = vpop.f32.mrb[0].mxu0
  %v270 = vpop.f32.mrb[0].mxu0
  %v271 = vadd.f32 %v88, %v270
  %v272 = vpop.f32.mrb[0].mxu0
  %273 = vmatprep.mubr.bf16.mxu0 0
  %274 = vmatmul.mubr.bf16.gmra.mrb[0].mxu0 %v134
  %v275 = vpop.f32.mrb[0].mxu0
  %v276 = vadd.f32 %v88, %v275
  %v277 = vpop.f32.mrb[0].mxu0
  %v278 = vpop.f32.mrb[0].mxu0
  %v279 = vadd.f32 %v88, %v278
  %v280 = vpop.f32.mrb[0].mxu0
  %281 = vmatprep.mubr.bf16.mxu0 0
  %282 = vmatmul.mubr.bf16.gmra.mrb[0].mxu0 %v137
  %v283 = vpop.f32.mrb[0].mxu0
  %v284 = vadd.f32 %v88, %v283
  %v285 = vpop.f32.mrb[0].mxu0
  %v286 = vpop.f32.mrb[0].mxu0
  %v287 = vadd.f32 %v88, %v286
  %v288 = vpop.f32.mrb[0].mxu0
  %289 = vmatprep.mubr.bf16.mxu0 0
  %290 = vmatmul.mubr.bf16.gmra.mrb[0].mxu0 %v140
  %v291 = vpop.f32.mrb[0].mxu0
  %v292 = vadd.f32 %v88, %v291
  %v293 = vpop.f32.mrb[0].mxu0
  %v294 = vpop.f32.mrb[0].mxu0
  %v295 = vadd.f32 %v88, %v294
  %v296 = vpop.f32.mrb[0].mxu0
  %297 = vmatprep.mubr.bf16.mxu0 0
  %298 = vmatmul.mubr.bf16.gmra.mrb[0].mxu0 %v143
  %v299 = vpop.f32.mrb[0].mxu0
  %v300 = vadd.f32 %v88, %v299
  %v301 = vpop.f32.mrb[0].mxu0
  %v302 = vpop.f32.mrb[0].mxu0
  %v303 = vadd.f32 %v88, %v302
  %v304 = vpop.f32.mrb[0].mxu0
  %305 = vdwg.mxu0
  %v306 = vmul.f32 %v180, 0.01
  %v307 = vmul.f32 %v183, 0.01
  %v308 = vmul.f32 %v188, 0.01
  %v309 = vmul.f32 %v191, 0.01
  %v310 = vmul.f32 %v196, 0.01
  %v311 = vmul.f32 %v199, 0.01
  %v312 = vmul.f32 %v204, 0.01
  %v313 = vmul.f32 %v207, 0.01
  %v314 = vmul.f32 %v212, 0.01
  %v315 = vmul.f32 %v215, 0.01
  %v316 = vmul.f32 %v220, 0.01
  %v317 = vmul.f32 %v223, 0.01
  %v318 = vmul.f32 %v228, 0.01
  %v319 = vmul.f32 %v231, 0.01
  %v320 = vmul.f32 %v236, 0.01
  %v321 = vmul.f32 %v239, 0.01
  %v322 = vmul.f32 %v244, 0.01
  %v323 = vmul.f32 %v247, 0.01
  %v324 = vmul.f32 %v252, 0.01
  %v325 = vmul.f32 %v255, 0.01
  %v326 = vmul.f32 %v260, 0.01
  %v327 = vmul.f32 %v263, 0.01
  %v328 = vmul.f32 %v268, 0.01
  %v329 = vmul.f32 %v271, 0.01
  %v330 = vmul.f32 %v276, 0.01
  %v331 = vmul.f32 %v279, 0.01
  %v332 = vmul.f32 %v284, 0.01
  %v333 = vmul.f32 %v287, 0.01
  %v334 = vmul.f32 %v292, 0.01
  %v335 = vmul.f32 %v295, 0.01
  %v336 = vmul.f32 %v300, 0.01
  %v337 = vmul.f32 %v303, 0.01
  %v338 = vmax.f32 %v180, %v306
  %v339 = vmax.f32 %v183, %v307
  %v340 = vmax.f32 %v188, %v308
  %v341 = vmax.f32 %v191, %v309
  %v342 = vmax.f32 %v196, %v310
  %v343 = vmax.f32 %v199, %v311
  %v344 = vmax.f32 %v204, %v312
  %v345 = vmax.f32 %v207, %v313
  %v346 = vmax.f32 %v212, %v314
  %v347 = vmax.f32 %v215, %v315
  %v348 = vmax.f32 %v220, %v316
  %v349 = vmax.f32 %v223, %v317
  %v350 = vmax.f32 %v228, %v318
  %v351 = vmax.f32 %v231, %v319
  %v352 = vmax.f32 %v236, %v320
  %v353 = vmax.f32 %v239, %v321
  %v354 = vmax.f32 %v244, %v322
  %v355 = vmax.f32 %v247, %v323
  %v356 = vmax.f32 %v252, %v324
  %v357 = vmax.f32 %v255, %v325
  %v358 = vmax.f32 %v260, %v326
  %v359 = vmax.f32 %v263, %v327
  %v360 = vmax.f32 %v268, %v328
  %v361 = vmax.f32 %v271, %v329
  %v362 = vmax.f32 %v276, %v330
  %v363 = vmax.f32 %v279, %v331
  %v364 = vmax.f32 %v284, %v332
  %v365 = vmax.f32 %v287, %v333
  %v366 = vmax.f32 %v292, %v334
  %v367 = vmax.f32 %v295, %v335
  %v368 = vmax.f32 %v300, %v336
  %v369 = vmax.f32 %v303, %v337
  %v370 = vld [vmem:[%s3] sm:$0xf]
  %v371 = vld [vmem:[%s3 + $0x4] sm:$0xf]
  %v372 = vld [vmem:[%s3 + $0x8] sm:$0xf]
  %v373 = vld [vmem:[%s3 + $0xc] sm:$0xf]
  %v374 = vld [vmem:[%s3 + $0x10] sm:$0xf]
  %v375 = vld [vmem:[%s3 + $0x14] sm:$0xf]
  %v376 = vld [vmem:[%s3 + $0x18] sm:$0xf]
  %v377 = vld [vmem:[%s3 + $0x1c] sm:$0xf]
  %v378 = vld [vmem:[%s4] sm:$0x1]
  %v379 = vpack.c.bf16 %v339, %v338
  %v380 = vpack.c.bf16 %v341, %v340
  %v381 = vpack.c.bf16 %v343, %v342
  %v382 = vpack.c.bf16 %v345, %v344
  %v383 = vpack.c.bf16 %v347, %v346
  %v384 = vpack.c.bf16 %v349, %v348
  %v385 = vpack.c.bf16 %v351, %v350
  %v386 = vpack.c.bf16 %v353, %v352
  %v387 = vpack.c.bf16 %v355, %v354
  %v388 = vpack.c.bf16 %v357, %v356
  %v389 = vpack.c.bf16 %v359, %v358
  %v390 = vpack.c.bf16 %v361, %v360
  %v391 = vpack.c.bf16 %v363, %v362
  %v392 = vpack.c.bf16 %v365, %v364
  %v393 = vpack.c.bf16 %v367, %v366
  %v394 = vpack.c.bf16 %v369, %v368
  %v396 = vlaneseq
  %v397 = vshrl.u32 %v396, 7
  %v398 = vsub.s32 0, %v397
  %v399 = vrot.slane %v378, %v398
  %v409 = vunpack.c.l.b16 %v370
  %v410 = vunpack.c.l.b16 %v371
  %v411 = vunpack.c.l.b16 %v372
  %v412 = vunpack.c.l.b16 %v373
  %v413 = vunpack.c.l.b16 %v374
  %v414 = vunpack.c.l.b16 %v375
  %v415 = vunpack.c.l.b16 %v376
  %v416 = vunpack.c.l.b16 %v377
  %v417 = vpack.c.b16 %v410, %v409
  %v418 = vpack.c.b16 %v412, %v411
  %v419 = vpack.c.b16 %v414, %v413
  %v420 = vpack.c.b16 %v416, %v415
  %vm425 = vcmask 523264
  %v427 = vsel %vm425, %v379, 0
  %v430 = vsel %vm425, %v380, 0
  %v433 = vsel %vm425, %v381, 0
  %v436 = vsel %vm425, %v382, 0
  %v439 = vsel %vm425, %v383, 0
  %v442 = vsel %vm425, %v384, 0
  %v445 = vsel %vm425, %v385, 0
  %v448 = vsel %vm425, %v386, 0
  %v451 = vsel %vm425, %v387, 0
  %v454 = vsel %vm425, %v388, 0
  %v457 = vsel %vm425, %v389, 0
  %v460 = vsel %vm425, %v390, 0
  %v463 = vsel %vm425, %v391, 0
  %v466 = vsel %vm425, %v392, 0
  %v469 = vsel %vm425, %v393, 0
  %v472 = vsel %vm425, %v394, 0
  %474 = vmatprep.subr.bf16.mxu0 0
  %475 = vmatpush1.bf16.msra.mxu0 %v417
  %476 = vmatprep.subr.bf16.mxu0 0
  %477 = vmatpush1.bf16.msra.mxu0 %v418
  %478 = vmatprep.subr.bf16.mxu0 0
  %479 = vmatpush1.bf16.msra.mxu0 %v419
  %480 = vmatprep.subr.bf16.mxu0 0
  %481 = vmatpush1.bf16.msra.mxu0 %v420
  %482 = vmatprep.subr.bf16.mxu0 0
  %483 = vmatpush1.bf16.msra.mxu0 0
  %484 = vmatprep.subr.bf16.mxu0 0
  %485 = vmatpush1.bf16.msra.mxu0 0
  %486 = vmatprep.subr.bf16.mxu0 0
  %487 = vmatpush1.bf16.msra.mxu0 0
  %488 = vmatprep.subr.bf16.mxu0 0
  %489 = vmatpush1.bf16.msra.mxu0 0
  %490 = vmatprep.subr.bf16.mxu0 0
  %491 = vmatpush1.bf16.msra.mxu0 0
  %492 = vmatprep.subr.bf16.mxu0 0
  %493 = vmatpush1.bf16.msra.mxu0 0
  %494 = vmatprep.subr.bf16.mxu0 0
  %495 = vmatpush1.bf16.msra.mxu0 0
  %496 = vmatprep.subr.bf16.mxu0 0
  %497 = vmatpush1.bf16.msra.mxu0 0
  %498 = vmatprep.subr.bf16.mxu0 0
  %499 = vmatpush1.bf16.msra.mxu0 0
  %500 = vmatprep.subr.bf16.mxu0 0
  %501 = vmatpush1.bf16.msra.mxu0 0
  %502 = vmatprep.subr.bf16.mxu0 0
  %503 = vmatpush1.bf16.msra.mxu0 0
  %504 = vmatprep.subr.bf16.mxu0 0
  %505 = vmatpush1.bf16.msra.mxu0 0
  %506 = vmatprep.mubr.bf16.mxu0 0
  %507 = vmatmul.mubr.bf16.gmra.mrb[0].mxu0 %v427
  %v508 = vpop.f32.mrb[0].mxu0
  %v509 = vadd.f32 %v399, %v508
  %v510 = vpop.f32.mrb[0].mxu0
  %v511 = vpop.f32.mrb[0].mxu0
  %v512 = vadd.f32 %v399, %v511
  %v513 = vpop.f32.mrb[0].mxu0
  %514 = vmatprep.mubr.bf16.mxu0 0
  %515 = vmatmul.mubr.bf16.gmra.mrb[0].mxu0 %v430
  %v516 = vpop.f32.mrb[0].mxu0
  %v517 = vadd.f32 %v399, %v516
  %v518 = vpop.f32.mrb[0].mxu0
  %v519 = vpop.f32.mrb[0].mxu0
  %v520 = vadd.f32 %v399, %v519
  %v521 = vpop.f32.mrb[0].mxu0
  %522 = vmatprep.mubr.bf16.mxu0 0
  %523 = vmatmul.mubr.bf16.gmra.mrb[0].mxu0 %v433
  %v524 = vpop.f32.mrb[0].mxu0
  %v525 = vadd.f32 %v399, %v524
  %v526 = vpop.f32.mrb[0].mxu0
  %v527 = vpop.f32.mrb[0].mxu0
  %v528 = vadd.f32 %v399, %v527
  %v529 = vpop.f32.mrb[0].mxu0
  %530 = vmatprep.mubr.bf16.mxu0 0
  %531 = vmatmul.mubr.bf16.gmra.mrb[0].mxu0 %v436
  %v532 = vpop.f32.mrb[0].mxu0
  %v533 = vadd.f32 %v399, %v532
  %v534 = vpop.f32.mrb[0].mxu0
  %v535 = vpop.f32.mrb[0].mxu0
  %v536 = vadd.f32 %v399, %v535
  %v537 = vpop.f32.mrb[0].mxu0
  %538 = vmatprep.mubr.bf16.mxu0 0
  %539 = vmatmul.mubr.bf16.gmra.mrb[0].mxu0 %v439
  %v540 = vpop.f32.mrb[0].mxu0
  %v541 = vadd.f32 %v399, %v540
  %v542 = vpop.f32.mrb[0].mxu0
  %v543 = vpop.f32.mrb[0].mxu0
  %v544 = vadd.f32 %v399, %v543
  %v545 = vpop.f32.mrb[0].mxu0
  %546 = vmatprep.mubr.bf16.mxu0 0
  %547 = vmatmul.mubr.bf16.gmra.mrb[0].mxu0 %v442
  %v548 = vpop.f32.mrb[0].mxu0
  %v549 = vadd.f32 %v399, %v548
  %v550 = vpop.f32.mrb[0].mxu0
  %v551 = vpop.f32.mrb[0].mxu0
  %v552 = vadd.f32 %v399, %v551
  %v553 = vpop.f32.mrb[0].mxu0
  %554 = vmatprep.mubr.bf16.mxu0 0
  %555 = vmatmul.mubr.bf16.gmra.mrb[0].mxu0 %v445
  %v556 = vpop.f32.mrb[0].mxu0
  %v557 = vadd.f32 %v399, %v556
  %v558 = vpop.f32.mrb[0].mxu0
  %v559 = vpop.f32.mrb[0].mxu0
  %v560 = vadd.f32 %v399, %v559
  %v561 = vpop.f32.mrb[0].mxu0
  %562 = vmatprep.mubr.bf16.mxu0 0
  %563 = vmatmul.mubr.bf16.gmra.mrb[0].mxu0 %v448
  %v564 = vpop.f32.mrb[0].mxu0
  %v565 = vadd.f32 %v399, %v564
  %v566 = vpop.f32.mrb[0].mxu0
  %v567 = vpop.f32.mrb[0].mxu0
  %v568 = vadd.f32 %v399, %v567
  %v569 = vpop.f32.mrb[0].mxu0
  %570 = vmatprep.mubr.bf16.mxu0 0
  %571 = vmatmul.mubr.bf16.gmra.mrb[0].mxu0 %v451
  %v572 = vpop.f32.mrb[0].mxu0
  %v573 = vadd.f32 %v399, %v572
  %v574 = vpop.f32.mrb[0].mxu0
  %v575 = vpop.f32.mrb[0].mxu0
  %v576 = vadd.f32 %v399, %v575
  %v577 = vpop.f32.mrb[0].mxu0
  %578 = vmatprep.mubr.bf16.mxu0 0
  %579 = vmatmul.mubr.bf16.gmra.mrb[0].mxu0 %v454
  %v580 = vpop.f32.mrb[0].mxu0
  %v581 = vadd.f32 %v399, %v580
  %v582 = vpop.f32.mrb[0].mxu0
  %v583 = vpop.f32.mrb[0].mxu0
  %v584 = vadd.f32 %v399, %v583
  %v585 = vpop.f32.mrb[0].mxu0
  %586 = vmatprep.mubr.bf16.mxu0 0
  %587 = vmatmul.mubr.bf16.gmra.mrb[0].mxu0 %v457
  %v588 = vpop.f32.mrb[0].mxu0
  %v589 = vadd.f32 %v399, %v588
  %v590 = vpop.f32.mrb[0].mxu0
  %v591 = vpop.f32.mrb[0].mxu0
  %v592 = vadd.f32 %v399, %v591
  %v593 = vpop.f32.mrb[0].mxu0
  %594 = vmatprep.mubr.bf16.mxu0 0
  %595 = vmatmul.mubr.bf16.gmra.mrb[0].mxu0 %v460
  %v596 = vpop.f32.mrb[0].mxu0
  %v597 = vadd.f32 %v399, %v596
  %v598 = vpop.f32.mrb[0].mxu0
  %v599 = vpop.f32.mrb[0].mxu0
  %v600 = vadd.f32 %v399, %v599
  %v601 = vpop.f32.mrb[0].mxu0
  %602 = vmatprep.mubr.bf16.mxu0 0
  %603 = vmatmul.mubr.bf16.gmra.mrb[0].mxu0 %v463
  %v604 = vpop.f32.mrb[0].mxu0
  %v605 = vadd.f32 %v399, %v604
  %v606 = vpop.f32.mrb[0].mxu0
  %v607 = vpop.f32.mrb[0].mxu0
  %v608 = vadd.f32 %v399, %v607
  %v609 = vpop.f32.mrb[0].mxu0
  %610 = vmatprep.mubr.bf16.mxu0 0
  %611 = vmatmul.mubr.bf16.gmra.mrb[0].mxu0 %v466
  %v612 = vpop.f32.mrb[0].mxu0
  %v613 = vadd.f32 %v399, %v612
  %v614 = vpop.f32.mrb[0].mxu0
  %v615 = vpop.f32.mrb[0].mxu0
  %v616 = vadd.f32 %v399, %v615
  %v617 = vpop.f32.mrb[0].mxu0
  %618 = vmatprep.mubr.bf16.mxu0 0
  %619 = vmatmul.mubr.bf16.gmra.mrb[0].mxu0 %v469
  %v620 = vpop.f32.mrb[0].mxu0
  %v621 = vadd.f32 %v399, %v620
  %v622 = vpop.f32.mrb[0].mxu0
  %v623 = vpop.f32.mrb[0].mxu0
  %v624 = vadd.f32 %v399, %v623
  %v625 = vpop.f32.mrb[0].mxu0
  %626 = vmatprep.mubr.bf16.mxu0 0
  %627 = vmatmul.mubr.bf16.gmra.mrb[0].mxu0 %v472
  %v628 = vpop.f32.mrb[0].mxu0
  %v629 = vadd.f32 %v399, %v628
  %v630 = vpop.f32.mrb[0].mxu0
  %v631 = vpop.f32.mrb[0].mxu0
  %v632 = vadd.f32 %v399, %v631
  %v633 = vpop.f32.mrb[0].mxu0
  %634 = vdwg.mxu0
  %v635 = vmul.f32 %v509, 0.01
  %v636 = vmul.f32 %v512, 0.01
  %v637 = vmul.f32 %v517, 0.01
  %v638 = vmul.f32 %v520, 0.01
  %v639 = vmul.f32 %v525, 0.01
  %v640 = vmul.f32 %v528, 0.01
  %v641 = vmul.f32 %v533, 0.01
  %v642 = vmul.f32 %v536, 0.01
  %v643 = vmul.f32 %v541, 0.01
  %v644 = vmul.f32 %v544, 0.01
  %v645 = vmul.f32 %v549, 0.01
  %v646 = vmul.f32 %v552, 0.01
  %v647 = vmul.f32 %v557, 0.01
  %v648 = vmul.f32 %v560, 0.01
  %v649 = vmul.f32 %v565, 0.01
  %v650 = vmul.f32 %v568, 0.01
  %v651 = vmul.f32 %v573, 0.01
  %v652 = vmul.f32 %v576, 0.01
  %v653 = vmul.f32 %v581, 0.01
  %v654 = vmul.f32 %v584, 0.01
  %v655 = vmul.f32 %v589, 0.01
  %v656 = vmul.f32 %v592, 0.01
  %v657 = vmul.f32 %v597, 0.01
  %v658 = vmul.f32 %v600, 0.01
  %v659 = vmul.f32 %v605, 0.01
  %v660 = vmul.f32 %v608, 0.01
  %v661 = vmul.f32 %v613, 0.01
  %v662 = vmul.f32 %v616, 0.01
  %v663 = vmul.f32 %v621, 0.01
  %v664 = vmul.f32 %v624, 0.01
  %v665 = vmul.f32 %v629, 0.01
  %v666 = vmul.f32 %v632, 0.01
  %v667 = vmax.f32 %v509, %v635
  %v668 = vmax.f32 %v512, %v636
  %v669 = vmax.f32 %v517, %v637
  %v670 = vmax.f32 %v520, %v638
  %v671 = vmax.f32 %v525, %v639
  %v672 = vmax.f32 %v528, %v640
  %v673 = vmax.f32 %v533, %v641
  %v674 = vmax.f32 %v536, %v642
  %v675 = vmax.f32 %v541, %v643
  %v676 = vmax.f32 %v544, %v644
  %v677 = vmax.f32 %v549, %v645
  %v678 = vmax.f32 %v552, %v646
  %v679 = vmax.f32 %v557, %v647
  %v680 = vmax.f32 %v560, %v648
  %v681 = vmax.f32 %v565, %v649
  %v682 = vmax.f32 %v568, %v650
  %v683 = vmax.f32 %v573, %v651
  %v684 = vmax.f32 %v576, %v652
  %v685 = vmax.f32 %v581, %v653
  %v686 = vmax.f32 %v584, %v654
  %v687 = vmax.f32 %v589, %v655
  %v688 = vmax.f32 %v592, %v656
  %v689 = vmax.f32 %v597, %v657
  %v690 = vmax.f32 %v600, %v658
  %v691 = vmax.f32 %v605, %v659
  %v692 = vmax.f32 %v608, %v660
  %v693 = vmax.f32 %v613, %v661
  %v694 = vmax.f32 %v616, %v662
  %v695 = vmax.f32 %v621, %v663
  %v696 = vmax.f32 %v624, %v664
  %v697 = vmax.f32 %v629, %v665
  %v698 = vmax.f32 %v632, %v666
  %v699 = vld [vmem:[%s5] sm:$0xf]
  %v700 = vld [vmem:[%s5 + $0x4] sm:$0xf]
  %v701 = vld [vmem:[%s5 + $0x8] sm:$0xf]
  %v702 = vld [vmem:[%s5 + $0xc] sm:$0xf]
  %v703 = vld [vmem:[%s6] sm:$0x1]
  %v704 = vpack.c.bf16 %v668, %v667
  %v705 = vpack.c.bf16 %v670, %v669
  %v706 = vpack.c.bf16 %v672, %v671
  %v707 = vpack.c.bf16 %v674, %v673
  %v708 = vpack.c.bf16 %v676, %v675
  %v709 = vpack.c.bf16 %v678, %v677
  %v710 = vpack.c.bf16 %v680, %v679
  %v711 = vpack.c.bf16 %v682, %v681
  %v712 = vpack.c.bf16 %v684, %v683
  %v713 = vpack.c.bf16 %v686, %v685
  %v714 = vpack.c.bf16 %v688, %v687
  %v715 = vpack.c.bf16 %v690, %v689
  %v716 = vpack.c.bf16 %v692, %v691
  %v717 = vpack.c.bf16 %v694, %v693
  %v718 = vpack.c.bf16 %v696, %v695
  %v719 = vpack.c.bf16 %v698, %v697
  %v721 = vlaneseq
  %v722 = vshrl.u32 %v721, 7
  %v723 = vsub.s32 0, %v722
  %v724 = vrot.slane %v703, %v723
  %v730 = vunpack.c.l.b16 %v699
  %v731 = vunpack.c.l.b16 %v700
  %v732 = vunpack.c.l.b16 %v701
  %v733 = vunpack.c.l.b16 %v702
  %v734 = vpack.c.b16 %v731, %v730
  %v735 = vpack.c.b16 %v733, %v732
  %vm738 = vcmask 261120
  %v740 = vsel %vm738, %v704, 0
  %v743 = vsel %vm738, %v705, 0
  %v746 = vsel %vm738, %v706, 0
  %v749 = vsel %vm738, %v707, 0
  %v752 = vsel %vm738, %v708, 0
  %v755 = vsel %vm738, %v709, 0
  %v758 = vsel %vm738, %v710, 0
  %v761 = vsel %vm738, %v711, 0
  %v764 = vsel %vm738, %v712, 0
  %v767 = vsel %vm738, %v713, 0
  %v770 = vsel %vm738, %v714, 0
  %v773 = vsel %vm738, %v715, 0
  %v776 = vsel %vm738, %v716, 0
  %v779 = vsel %vm738, %v717, 0
  %v782 = vsel %vm738, %v718, 0
  %v785 = vsel %vm738, %v719, 0
  %787 = vmatprep.subr.bf16.mxu0 0
  %788 = vmatpush1.bf16.msra.mxu0 %v734
  %789 = vmatprep.subr.bf16.mxu0 0
  %790 = vmatpush1.bf16.msra.mxu0 %v735
  %791 = vmatprep.subr.bf16.mxu0 0
  %792 = vmatpush1.bf16.msra.mxu0 0
  %793 = vmatprep.subr.bf16.mxu0 0
  %794 = vmatpush1.bf16.msra.mxu0 0
  %795 = vmatprep.subr.bf16.mxu0 0
  %796 = vmatpush1.bf16.msra.mxu0 0
  %797 = vmatprep.subr.bf16.mxu0 0
  %798 = vmatpush1.bf16.msra.mxu0 0
  %799 = vmatprep.subr.bf16.mxu0 0
  %800 = vmatpush1.bf16.msra.mxu0 0
  %801 = vmatprep.subr.bf16.mxu0 0
  %802 = vmatpush1.bf16.msra.mxu0 0
  %803 = vmatprep.subr.bf16.mxu0 0
  %804 = vmatpush1.bf16.msra.mxu0 0
  %805 = vmatprep.subr.bf16.mxu0 0
  %806 = vmatpush1.bf16.msra.mxu0 0
  %807 = vmatprep.subr.bf16.mxu0 0
  %808 = vmatpush1.bf16.msra.mxu0 0
  %809 = vmatprep.subr.bf16.mxu0 0
  %810 = vmatpush1.bf16.msra.mxu0 0
  %811 = vmatprep.subr.bf16.mxu0 0
  %812 = vmatpush1.bf16.msra.mxu0 0
  %813 = vmatprep.subr.bf16.mxu0 0
  %814 = vmatpush1.bf16.msra.mxu0 0
  %815 = vmatprep.subr.bf16.mxu0 0
  %816 = vmatpush1.bf16.msra.mxu0 0
  %817 = vmatprep.subr.bf16.mxu0 0
  %818 = vmatpush1.bf16.msra.mxu0 0
  %819 = vmatprep.mubr.bf16.mxu0 0
  %820 = vmatmul.mubr.bf16.gmra.mrb[0].mxu0 %v740
  %v821 = vpop.f32.mrb[0].mxu0
  %v822 = vadd.f32 %v724, %v821
  %v823 = vpop.f32.mrb[0].mxu0
  %v824 = vpop.f32.mrb[0].mxu0
  %v825 = vadd.f32 %v724, %v824
  %v826 = vpop.f32.mrb[0].mxu0
  %827 = vmatprep.mubr.bf16.mxu0 0
  %828 = vmatmul.mubr.bf16.gmra.mrb[0].mxu0 %v743
  %v829 = vpop.f32.mrb[0].mxu0
  %v830 = vadd.f32 %v724, %v829
  %v831 = vpop.f32.mrb[0].mxu0
  %v832 = vpop.f32.mrb[0].mxu0
  %v833 = vadd.f32 %v724, %v832
  %v834 = vpop.f32.mrb[0].mxu0
  %835 = vmatprep.mubr.bf16.mxu0 0
  %836 = vmatmul.mubr.bf16.gmra.mrb[0].mxu0 %v746
  %v837 = vpop.f32.mrb[0].mxu0
  %v838 = vadd.f32 %v724, %v837
  %v839 = vpop.f32.mrb[0].mxu0
  %v840 = vpop.f32.mrb[0].mxu0
  %v841 = vadd.f32 %v724, %v840
  %v842 = vpop.f32.mrb[0].mxu0
  %843 = vmatprep.mubr.bf16.mxu0 0
  %844 = vmatmul.mubr.bf16.gmra.mrb[0].mxu0 %v749
  %v845 = vpop.f32.mrb[0].mxu0
  %v846 = vadd.f32 %v724, %v845
  %v847 = vpop.f32.mrb[0].mxu0
  %v848 = vpop.f32.mrb[0].mxu0
  %v849 = vadd.f32 %v724, %v848
  %v850 = vpop.f32.mrb[0].mxu0
  %851 = vmatprep.mubr.bf16.mxu0 0
  %852 = vmatmul.mubr.bf16.gmra.mrb[0].mxu0 %v752
  %v853 = vpop.f32.mrb[0].mxu0
  %v854 = vadd.f32 %v724, %v853
  %v855 = vpop.f32.mrb[0].mxu0
  %v856 = vpop.f32.mrb[0].mxu0
  %v857 = vadd.f32 %v724, %v856
  %v858 = vpop.f32.mrb[0].mxu0
  %859 = vmatprep.mubr.bf16.mxu0 0
  %860 = vmatmul.mubr.bf16.gmra.mrb[0].mxu0 %v755
  %v861 = vpop.f32.mrb[0].mxu0
  %v862 = vadd.f32 %v724, %v861
  %v863 = vpop.f32.mrb[0].mxu0
  %v864 = vpop.f32.mrb[0].mxu0
  %v865 = vadd.f32 %v724, %v864
  %v866 = vpop.f32.mrb[0].mxu0
  %867 = vmatprep.mubr.bf16.mxu0 0
  %868 = vmatmul.mubr.bf16.gmra.mrb[0].mxu0 %v758
  %v869 = vpop.f32.mrb[0].mxu0
  %v870 = vadd.f32 %v724, %v869
  %v871 = vpop.f32.mrb[0].mxu0
  %v872 = vpop.f32.mrb[0].mxu0
  %v873 = vadd.f32 %v724, %v872
  %v874 = vpop.f32.mrb[0].mxu0
  %875 = vmatprep.mubr.bf16.mxu0 0
  %876 = vmatmul.mubr.bf16.gmra.mrb[0].mxu0 %v761
  %v877 = vpop.f32.mrb[0].mxu0
  %v878 = vadd.f32 %v724, %v877
  %v879 = vpop.f32.mrb[0].mxu0
  %v880 = vpop.f32.mrb[0].mxu0
  %v881 = vadd.f32 %v724, %v880
  %v882 = vpop.f32.mrb[0].mxu0
  %883 = vmatprep.mubr.bf16.mxu0 0
  %884 = vmatmul.mubr.bf16.gmra.mrb[0].mxu0 %v764
  %v885 = vpop.f32.mrb[0].mxu0
  %v886 = vadd.f32 %v724, %v885
  %v887 = vpop.f32.mrb[0].mxu0
  %v888 = vpop.f32.mrb[0].mxu0
  %v889 = vadd.f32 %v724, %v888
  %v890 = vpop.f32.mrb[0].mxu0
  %891 = vmatprep.mubr.bf16.mxu0 0
  %892 = vmatmul.mubr.bf16.gmra.mrb[0].mxu0 %v767
  %v893 = vpop.f32.mrb[0].mxu0
  %v894 = vadd.f32 %v724, %v893
  %v895 = vpop.f32.mrb[0].mxu0
  %v896 = vpop.f32.mrb[0].mxu0
  %v897 = vadd.f32 %v724, %v896
  %v898 = vpop.f32.mrb[0].mxu0
  %899 = vmatprep.mubr.bf16.mxu0 0
  %900 = vmatmul.mubr.bf16.gmra.mrb[0].mxu0 %v770
  %v901 = vpop.f32.mrb[0].mxu0
  %v902 = vadd.f32 %v724, %v901
  %v903 = vpop.f32.mrb[0].mxu0
  %v904 = vpop.f32.mrb[0].mxu0
  %v905 = vadd.f32 %v724, %v904
  %v906 = vpop.f32.mrb[0].mxu0
  %907 = vmatprep.mubr.bf16.mxu0 0
  %908 = vmatmul.mubr.bf16.gmra.mrb[0].mxu0 %v773
  %v909 = vpop.f32.mrb[0].mxu0
  %v910 = vadd.f32 %v724, %v909
  %v911 = vpop.f32.mrb[0].mxu0
  %v912 = vpop.f32.mrb[0].mxu0
  %v913 = vadd.f32 %v724, %v912
  %v914 = vpop.f32.mrb[0].mxu0
  %915 = vmatprep.mubr.bf16.mxu0 0
  %916 = vmatmul.mubr.bf16.gmra.mrb[0].mxu0 %v776
  %v917 = vpop.f32.mrb[0].mxu0
  %v918 = vadd.f32 %v724, %v917
  %v919 = vpop.f32.mrb[0].mxu0
  %v920 = vpop.f32.mrb[0].mxu0
  %v921 = vadd.f32 %v724, %v920
  %v922 = vpop.f32.mrb[0].mxu0
  %923 = vmatprep.mubr.bf16.mxu0 0
  %924 = vmatmul.mubr.bf16.gmra.mrb[0].mxu0 %v779
  %v925 = vpop.f32.mrb[0].mxu0
  %v926 = vadd.f32 %v724, %v925
  %v927 = vpop.f32.mrb[0].mxu0
  %v928 = vpop.f32.mrb[0].mxu0
  %v929 = vadd.f32 %v724, %v928
  %v930 = vpop.f32.mrb[0].mxu0
  %931 = vmatprep.mubr.bf16.mxu0 0
  %932 = vmatmul.mubr.bf16.gmra.mrb[0].mxu0 %v782
  %v933 = vpop.f32.mrb[0].mxu0
  %v934 = vadd.f32 %v724, %v933
  %v935 = vpop.f32.mrb[0].mxu0
  %v936 = vpop.f32.mrb[0].mxu0
  %v937 = vadd.f32 %v724, %v936
  %v938 = vpop.f32.mrb[0].mxu0
  %939 = vmatprep.mubr.bf16.mxu0 0
  %940 = vmatmul.mubr.bf16.gmra.mrb[0].mxu0 %v785
  %v941 = vpop.f32.mrb[0].mxu0
  %v942 = vadd.f32 %v724, %v941
  %v943 = vpop.f32.mrb[0].mxu0
  %v944 = vpop.f32.mrb[0].mxu0
  %v945 = vadd.f32 %v724, %v944
  %v946 = vpop.f32.mrb[0].mxu0
  %947 = vdwg.mxu0
  %v948 = vmul.f32 %v822, 0.01
  %v949 = vmul.f32 %v825, 0.01
  %v950 = vmul.f32 %v830, 0.01
  %v951 = vmul.f32 %v833, 0.01
  %v952 = vmul.f32 %v838, 0.01
  %v953 = vmul.f32 %v841, 0.01
  %v954 = vmul.f32 %v846, 0.01
  %v955 = vmul.f32 %v849, 0.01
  %v956 = vmul.f32 %v854, 0.01
  %v957 = vmul.f32 %v857, 0.01
  %v958 = vmul.f32 %v862, 0.01
  %v959 = vmul.f32 %v865, 0.01
  %v960 = vmul.f32 %v870, 0.01
  %v961 = vmul.f32 %v873, 0.01
  %v962 = vmul.f32 %v878, 0.01
  %v963 = vmul.f32 %v881, 0.01
  %v964 = vmul.f32 %v886, 0.01
  %v965 = vmul.f32 %v889, 0.01
  %v966 = vmul.f32 %v894, 0.01
  %v967 = vmul.f32 %v897, 0.01
  %v968 = vmul.f32 %v902, 0.01
  %v969 = vmul.f32 %v905, 0.01
  %v970 = vmul.f32 %v910, 0.01
  %v971 = vmul.f32 %v913, 0.01
  %v972 = vmul.f32 %v918, 0.01
  %v973 = vmul.f32 %v921, 0.01
  %v974 = vmul.f32 %v926, 0.01
  %v975 = vmul.f32 %v929, 0.01
  %v976 = vmul.f32 %v934, 0.01
  %v977 = vmul.f32 %v937, 0.01
  %v978 = vmul.f32 %v942, 0.01
  %v979 = vmul.f32 %v945, 0.01
  %v980 = vmax.f32 %v822, %v948
  %v981 = vmax.f32 %v825, %v949
  %v982 = vmax.f32 %v830, %v950
  %v983 = vmax.f32 %v833, %v951
  %v984 = vmax.f32 %v838, %v952
  %v985 = vmax.f32 %v841, %v953
  %v986 = vmax.f32 %v846, %v954
  %v987 = vmax.f32 %v849, %v955
  %v988 = vmax.f32 %v854, %v956
  %v989 = vmax.f32 %v857, %v957
  %v990 = vmax.f32 %v862, %v958
  %v991 = vmax.f32 %v865, %v959
  %v992 = vmax.f32 %v870, %v960
  %v993 = vmax.f32 %v873, %v961
  %v994 = vmax.f32 %v878, %v962
  %v995 = vmax.f32 %v881, %v963
  %v996 = vmax.f32 %v886, %v964
  %v997 = vmax.f32 %v889, %v965
  %v998 = vmax.f32 %v894, %v966
  %v999 = vmax.f32 %v897, %v967
  %v1000 = vmax.f32 %v902, %v968
  %v1001 = vmax.f32 %v905, %v969
  %v1002 = vmax.f32 %v910, %v970
  %v1003 = vmax.f32 %v913, %v971
  %v1004 = vmax.f32 %v918, %v972
  %v1005 = vmax.f32 %v921, %v973
  %v1006 = vmax.f32 %v926, %v974
  %v1007 = vmax.f32 %v929, %v975
  %v1008 = vmax.f32 %v934, %v976
  %v1009 = vmax.f32 %v937, %v977
  %v1010 = vmax.f32 %v942, %v978
  %v1011 = vmax.f32 %v945, %v979
  %v1012 = vpack.c.bf16 %v981, %v980
  %v1013 = vpack.c.bf16 %v983, %v982
  %v1014 = vpack.c.bf16 %v985, %v984
  %v1015 = vpack.c.bf16 %v987, %v986
  %v1016 = vpack.c.bf16 %v989, %v988
  %v1017 = vpack.c.bf16 %v991, %v990
  %v1018 = vpack.c.bf16 %v993, %v992
  %v1019 = vpack.c.bf16 %v995, %v994
  %v1020 = vpack.c.bf16 %v997, %v996
  %v1021 = vpack.c.bf16 %v999, %v998
  %v1022 = vpack.c.bf16 %v1001, %v1000
  %v1023 = vpack.c.bf16 %v1003, %v1002
  %v1024 = vpack.c.bf16 %v1005, %v1004
  %v1025 = vpack.c.bf16 %v1007, %v1006
  %v1026 = vpack.c.bf16 %v1009, %v1008
  %v1027 = vpack.c.bf16 %v1011, %v1010
  %v1029 = vsel %vm738, %v1012, 0
  %v1032 = vsel %vm738, %v1013, 0
  %v1035 = vsel %vm738, %v1014, 0
  %v1038 = vsel %vm738, %v1015, 0
  %v1041 = vsel %vm738, %v1016, 0
  %v1044 = vsel %vm738, %v1017, 0
  %v1047 = vsel %vm738, %v1018, 0
  %v1050 = vsel %vm738, %v1019, 0
  %v1053 = vsel %vm738, %v1020, 0
  %v1056 = vsel %vm738, %v1021, 0
  %v1059 = vsel %vm738, %v1022, 0
  %v1062 = vsel %vm738, %v1023, 0
  %v1065 = vsel %vm738, %v1024, 0
  %v1068 = vsel %vm738, %v1025, 0
  %v1071 = vsel %vm738, %v1026, 0
  %v1074 = vsel %vm738, %v1027, 0
  %1076 = vmatprep.subr.bf16.mxu0 0
  %1077 = vmatpush1.bf16.msra.mxu0 %v734
  %1078 = vmatprep.subr.bf16.mxu0 0
  %1079 = vmatpush1.bf16.msra.mxu0 %v735
  %1080 = vmatprep.subr.bf16.mxu0 0
  %1081 = vmatpush1.bf16.msra.mxu0 0
  %1082 = vmatprep.subr.bf16.mxu0 0
  %1083 = vmatpush1.bf16.msra.mxu0 0
  %1084 = vmatprep.subr.bf16.mxu0 0
  %1085 = vmatpush1.bf16.msra.mxu0 0
  %1086 = vmatprep.subr.bf16.mxu0 0
  %1087 = vmatpush1.bf16.msra.mxu0 0
  %1088 = vmatprep.subr.bf16.mxu0 0
  %1089 = vmatpush1.bf16.msra.mxu0 0
  %1090 = vmatprep.subr.bf16.mxu0 0
  %1091 = vmatpush1.bf16.msra.mxu0 0
  %1092 = vmatprep.subr.bf16.mxu0 0
  %1093 = vmatpush1.bf16.msra.mxu0 0
  %1094 = vmatprep.subr.bf16.mxu0 0
  %1095 = vmatpush1.bf16.msra.mxu0 0
  %1096 = vmatprep.subr.bf16.mxu0 0
  %1097 = vmatpush1.bf16.msra.mxu0 0
  %1098 = vmatprep.subr.bf16.mxu0 0
  %1099 = vmatpush1.bf16.msra.mxu0 0
  %1100 = vmatprep.subr.bf16.mxu0 0
  %1101 = vmatpush1.bf16.msra.mxu0 0
  %1102 = vmatprep.subr.bf16.mxu0 0
  %1103 = vmatpush1.bf16.msra.mxu0 0
  %1104 = vmatprep.subr.bf16.mxu0 0
  %1105 = vmatpush1.bf16.msra.mxu0 0
  %1106 = vmatprep.subr.bf16.mxu0 0
  %1107 = vmatpush1.bf16.msra.mxu0 0
  %1108 = vmatprep.mubr.bf16.mxu0 0
  %1109 = vmatmul.mubr.bf16.gmra.mrb[0].mxu0 %v1029
  %v1110 = vpop.f32.mrb[0].mxu0
  %v1111 = vadd.f32 %v724, %v1110
  %v1112 = vpop.f32.mrb[0].mxu0
  %v1113 = vpop.f32.mrb[0].mxu0
  %v1114 = vadd.f32 %v724, %v1113
  %v1115 = vpop.f32.mrb[0].mxu0
  %1116 = vmatprep.mubr.bf16.mxu0 0
  %1117 = vmatmul.mubr.bf16.gmra.mrb[0].mxu0 %v1032
  %v1118 = vpop.f32.mrb[0].mxu0
  %v1119 = vadd.f32 %v724, %v1118
  %v1120 = vpop.f32.mrb[0].mxu0
  %v1121 = vpop.f32.mrb[0].mxu0
  %v1122 = vadd.f32 %v724, %v1121
  %v1123 = vpop.f32.mrb[0].mxu0
  %1124 = vmatprep.mubr.bf16.mxu0 0
  %1125 = vmatmul.mubr.bf16.gmra.mrb[0].mxu0 %v1035
  %v1126 = vpop.f32.mrb[0].mxu0
  %v1127 = vadd.f32 %v724, %v1126
  %v1128 = vpop.f32.mrb[0].mxu0
  %v1129 = vpop.f32.mrb[0].mxu0
  %v1130 = vadd.f32 %v724, %v1129
  %v1131 = vpop.f32.mrb[0].mxu0
  %1132 = vmatprep.mubr.bf16.mxu0 0
  %1133 = vmatmul.mubr.bf16.gmra.mrb[0].mxu0 %v1038
  %v1134 = vpop.f32.mrb[0].mxu0
  %v1135 = vadd.f32 %v724, %v1134
  %v1136 = vpop.f32.mrb[0].mxu0
  %v1137 = vpop.f32.mrb[0].mxu0
  %v1138 = vadd.f32 %v724, %v1137
  %v1139 = vpop.f32.mrb[0].mxu0
  %1140 = vmatprep.mubr.bf16.mxu0 0
  %1141 = vmatmul.mubr.bf16.gmra.mrb[0].mxu0 %v1041
  %v1142 = vpop.f32.mrb[0].mxu0
  %v1143 = vadd.f32 %v724, %v1142
  %v1144 = vpop.f32.mrb[0].mxu0
  %v1145 = vpop.f32.mrb[0].mxu0
  %v1146 = vadd.f32 %v724, %v1145
  %v1147 = vpop.f32.mrb[0].mxu0
  %1148 = vmatprep.mubr.bf16.mxu0 0
  %1149 = vmatmul.mubr.bf16.gmra.mrb[0].mxu0 %v1044
  %v1150 = vpop.f32.mrb[0].mxu0
  %v1151 = vadd.f32 %v724, %v1150
  %v1152 = vpop.f32.mrb[0].mxu0
  %v1153 = vpop.f32.mrb[0].mxu0
  %v1154 = vadd.f32 %v724, %v1153
  %v1155 = vpop.f32.mrb[0].mxu0
  %1156 = vmatprep.mubr.bf16.mxu0 0
  %1157 = vmatmul.mubr.bf16.gmra.mrb[0].mxu0 %v1047
  %v1158 = vpop.f32.mrb[0].mxu0
  %v1159 = vadd.f32 %v724, %v1158
  %v1160 = vpop.f32.mrb[0].mxu0
  %v1161 = vpop.f32.mrb[0].mxu0
  %v1162 = vadd.f32 %v724, %v1161
  %v1163 = vpop.f32.mrb[0].mxu0
  %1164 = vmatprep.mubr.bf16.mxu0 0
  %1165 = vmatmul.mubr.bf16.gmra.mrb[0].mxu0 %v1050
  %v1166 = vpop.f32.mrb[0].mxu0
  %v1167 = vadd.f32 %v724, %v1166
  %v1168 = vpop.f32.mrb[0].mxu0
  %v1169 = vpop.f32.mrb[0].mxu0
  %v1170 = vadd.f32 %v724, %v1169
  %v1171 = vpop.f32.mrb[0].mxu0
  %1172 = vmatprep.mubr.bf16.mxu0 0
  %1173 = vmatmul.mubr.bf16.gmra.mrb[0].mxu0 %v1053
  %v1174 = vpop.f32.mrb[0].mxu0
  %v1175 = vadd.f32 %v724, %v1174
  %v1176 = vpop.f32.mrb[0].mxu0
  %v1177 = vpop.f32.mrb[0].mxu0
  %v1178 = vadd.f32 %v724, %v1177
  %v1179 = vpop.f32.mrb[0].mxu0
  %1180 = vmatprep.mubr.bf16.mxu0 0
  %1181 = vmatmul.mubr.bf16.gmra.mrb[0].mxu0 %v1056
  %v1182 = vpop.f32.mrb[0].mxu0
  %v1183 = vadd.f32 %v724, %v1182
  %v1184 = vpop.f32.mrb[0].mxu0
  %v1185 = vpop.f32.mrb[0].mxu0
  %v1186 = vadd.f32 %v724, %v1185
  %v1187 = vpop.f32.mrb[0].mxu0
  %1188 = vmatprep.mubr.bf16.mxu0 0
  %1189 = vmatmul.mubr.bf16.gmra.mrb[0].mxu0 %v1059
  %v1190 = vpop.f32.mrb[0].mxu0
  %v1191 = vadd.f32 %v724, %v1190
  %v1192 = vpop.f32.mrb[0].mxu0
  %v1193 = vpop.f32.mrb[0].mxu0
  %v1194 = vadd.f32 %v724, %v1193
  %v1195 = vpop.f32.mrb[0].mxu0
  %1196 = vmatprep.mubr.bf16.mxu0 0
  %1197 = vmatmul.mubr.bf16.gmra.mrb[0].mxu0 %v1062
  %v1198 = vpop.f32.mrb[0].mxu0
  %v1199 = vadd.f32 %v724, %v1198
  %v1200 = vpop.f32.mrb[0].mxu0
  %v1201 = vpop.f32.mrb[0].mxu0
  %v1202 = vadd.f32 %v724, %v1201
  %v1203 = vpop.f32.mrb[0].mxu0
  %1204 = vmatprep.mubr.bf16.mxu0 0
  %1205 = vmatmul.mubr.bf16.gmra.mrb[0].mxu0 %v1065
  %v1206 = vpop.f32.mrb[0].mxu0
  %v1207 = vadd.f32 %v724, %v1206
  %v1208 = vpop.f32.mrb[0].mxu0
  %v1209 = vpop.f32.mrb[0].mxu0
  %v1210 = vadd.f32 %v724, %v1209
  %v1211 = vpop.f32.mrb[0].mxu0
  %1212 = vmatprep.mubr.bf16.mxu0 0
  %1213 = vmatmul.mubr.bf16.gmra.mrb[0].mxu0 %v1068
  %v1214 = vpop.f32.mrb[0].mxu0
  %v1215 = vadd.f32 %v724, %v1214
  %v1216 = vpop.f32.mrb[0].mxu0
  %v1217 = vpop.f32.mrb[0].mxu0
  %v1218 = vadd.f32 %v724, %v1217
  %v1219 = vpop.f32.mrb[0].mxu0
  %1220 = vmatprep.mubr.bf16.mxu0 0
  %1221 = vmatmul.mubr.bf16.gmra.mrb[0].mxu0 %v1071
  %v1222 = vpop.f32.mrb[0].mxu0
  %v1223 = vadd.f32 %v724, %v1222
  %v1224 = vpop.f32.mrb[0].mxu0
  %v1225 = vpop.f32.mrb[0].mxu0
  %v1226 = vadd.f32 %v724, %v1225
  %v1227 = vpop.f32.mrb[0].mxu0
  %1228 = vmatprep.mubr.bf16.mxu0 0
  %1229 = vmatmul.mubr.bf16.gmra.mrb[0].mxu0 %v1074
  %v1230 = vpop.f32.mrb[0].mxu0
  %v1231 = vadd.f32 %v724, %v1230
  %v1232 = vpop.f32.mrb[0].mxu0
  %v1233 = vpop.f32.mrb[0].mxu0
  %v1234 = vadd.f32 %v724, %v1233
  %v1235 = vpop.f32.mrb[0].mxu0
  %1236 = vdwg.mxu0
  %v1237 = vmul.f32 %v1111, 0.01
  %v1238 = vmul.f32 %v1114, 0.01
  %v1239 = vmul.f32 %v1119, 0.01
  %v1240 = vmul.f32 %v1122, 0.01
  %v1241 = vmul.f32 %v1127, 0.01
  %v1242 = vmul.f32 %v1130, 0.01
  %v1243 = vmul.f32 %v1135, 0.01
  %v1244 = vmul.f32 %v1138, 0.01
  %v1245 = vmul.f32 %v1143, 0.01
  %v1246 = vmul.f32 %v1146, 0.01
  %v1247 = vmul.f32 %v1151, 0.01
  %v1248 = vmul.f32 %v1154, 0.01
  %v1249 = vmul.f32 %v1159, 0.01
  %v1250 = vmul.f32 %v1162, 0.01
  %v1251 = vmul.f32 %v1167, 0.01
  %v1252 = vmul.f32 %v1170, 0.01
  %v1253 = vmul.f32 %v1175, 0.01
  %v1254 = vmul.f32 %v1178, 0.01
  %v1255 = vmul.f32 %v1183, 0.01
  %v1256 = vmul.f32 %v1186, 0.01
  %v1257 = vmul.f32 %v1191, 0.01
  %v1258 = vmul.f32 %v1194, 0.01
  %v1259 = vmul.f32 %v1199, 0.01
  %v1260 = vmul.f32 %v1202, 0.01
  %v1261 = vmul.f32 %v1207, 0.01
  %v1262 = vmul.f32 %v1210, 0.01
  %v1263 = vmul.f32 %v1215, 0.01
  %v1264 = vmul.f32 %v1218, 0.01
  %v1265 = vmul.f32 %v1223, 0.01
  %v1266 = vmul.f32 %v1226, 0.01
  %v1267 = vmul.f32 %v1231, 0.01
  %v1268 = vmul.f32 %v1234, 0.01
  %v1269 = vmax.f32 %v1111, %v1237
  %v1270 = vmax.f32 %v1114, %v1238
  %v1271 = vmax.f32 %v1119, %v1239
  %v1272 = vmax.f32 %v1122, %v1240
  %v1273 = vmax.f32 %v1127, %v1241
  %v1274 = vmax.f32 %v1130, %v1242
  %v1275 = vmax.f32 %v1135, %v1243
  %v1276 = vmax.f32 %v1138, %v1244
  %v1277 = vmax.f32 %v1143, %v1245
  %v1278 = vmax.f32 %v1146, %v1246
  %v1279 = vmax.f32 %v1151, %v1247
  %v1280 = vmax.f32 %v1154, %v1248
  %v1281 = vmax.f32 %v1159, %v1249
  %v1282 = vmax.f32 %v1162, %v1250
  %v1283 = vmax.f32 %v1167, %v1251
  %v1284 = vmax.f32 %v1170, %v1252
  %v1285 = vmax.f32 %v1175, %v1253
  %v1286 = vmax.f32 %v1178, %v1254
  %v1287 = vmax.f32 %v1183, %v1255
  %v1288 = vmax.f32 %v1186, %v1256
  %v1289 = vmax.f32 %v1191, %v1257
  %v1290 = vmax.f32 %v1194, %v1258
  %v1291 = vmax.f32 %v1199, %v1259
  %v1292 = vmax.f32 %v1202, %v1260
  %v1293 = vmax.f32 %v1207, %v1261
  %v1294 = vmax.f32 %v1210, %v1262
  %v1295 = vmax.f32 %v1215, %v1263
  %v1296 = vmax.f32 %v1218, %v1264
  %v1297 = vmax.f32 %v1223, %v1265
  %v1298 = vmax.f32 %v1226, %v1266
  %v1299 = vmax.f32 %v1231, %v1267
  %v1300 = vmax.f32 %v1234, %v1268
  %v1301 = vpack.c.bf16 %v1270, %v1269
  %v1302 = vpack.c.bf16 %v1272, %v1271
  %v1303 = vpack.c.bf16 %v1274, %v1273
  %v1304 = vpack.c.bf16 %v1276, %v1275
  %v1305 = vpack.c.bf16 %v1278, %v1277
  %v1306 = vpack.c.bf16 %v1280, %v1279
  %v1307 = vpack.c.bf16 %v1282, %v1281
  %v1308 = vpack.c.bf16 %v1284, %v1283
  %v1309 = vpack.c.bf16 %v1286, %v1285
  %v1310 = vpack.c.bf16 %v1288, %v1287
  %v1311 = vpack.c.bf16 %v1290, %v1289
  %v1312 = vpack.c.bf16 %v1292, %v1291
  %v1313 = vpack.c.bf16 %v1294, %v1293
  %v1314 = vpack.c.bf16 %v1296, %v1295
  %v1315 = vpack.c.bf16 %v1298, %v1297
  %v1316 = vpack.c.bf16 %v1300, %v1299
  %v1318 = vsel %vm738, %v1301, 0
  %v1321 = vsel %vm738, %v1302, 0
  %v1324 = vsel %vm738, %v1303, 0
  %v1327 = vsel %vm738, %v1304, 0
  %v1330 = vsel %vm738, %v1305, 0
  %v1333 = vsel %vm738, %v1306, 0
  %v1336 = vsel %vm738, %v1307, 0
  %v1339 = vsel %vm738, %v1308, 0
  %v1342 = vsel %vm738, %v1309, 0
  %v1345 = vsel %vm738, %v1310, 0
  %v1348 = vsel %vm738, %v1311, 0
  %v1351 = vsel %vm738, %v1312, 0
  %v1354 = vsel %vm738, %v1313, 0
  %v1357 = vsel %vm738, %v1314, 0
  %v1360 = vsel %vm738, %v1315, 0
  %v1363 = vsel %vm738, %v1316, 0
  %1365 = vmatprep.subr.bf16.mxu0 0
  %1366 = vmatpush1.bf16.msra.mxu0 %v734
  %1367 = vmatprep.subr.bf16.mxu0 0
  %1368 = vmatpush1.bf16.msra.mxu0 %v735
  %1369 = vmatprep.subr.bf16.mxu0 0
  %1370 = vmatpush1.bf16.msra.mxu0 0
  %1371 = vmatprep.subr.bf16.mxu0 0
  %1372 = vmatpush1.bf16.msra.mxu0 0
  %1373 = vmatprep.subr.bf16.mxu0 0
  %1374 = vmatpush1.bf16.msra.mxu0 0
  %1375 = vmatprep.subr.bf16.mxu0 0
  %1376 = vmatpush1.bf16.msra.mxu0 0
  %1377 = vmatprep.subr.bf16.mxu0 0
  %1378 = vmatpush1.bf16.msra.mxu0 0
  %1379 = vmatprep.subr.bf16.mxu0 0
  %1380 = vmatpush1.bf16.msra.mxu0 0
  %1381 = vmatprep.subr.bf16.mxu0 0
  %1382 = vmatpush1.bf16.msra.mxu0 0
  %1383 = vmatprep.subr.bf16.mxu0 0
  %1384 = vmatpush1.bf16.msra.mxu0 0
  %1385 = vmatprep.subr.bf16.mxu0 0
  %1386 = vmatpush1.bf16.msra.mxu0 0
  %1387 = vmatprep.subr.bf16.mxu0 0
  %1388 = vmatpush1.bf16.msra.mxu0 0
  %1389 = vmatprep.subr.bf16.mxu0 0
  %1390 = vmatpush1.bf16.msra.mxu0 0
  %1391 = vmatprep.subr.bf16.mxu0 0
  %1392 = vmatpush1.bf16.msra.mxu0 0
  %1393 = vmatprep.subr.bf16.mxu0 0
  %1394 = vmatpush1.bf16.msra.mxu0 0
  %1395 = vmatprep.subr.bf16.mxu0 0
  %1396 = vmatpush1.bf16.msra.mxu0 0
  %1397 = vmatprep.mubr.bf16.mxu0 0
  %1398 = vmatmul.mubr.bf16.gmra.mrb[0].mxu0 %v1318
  %v1399 = vpop.f32.mrb[0].mxu0
  %v1400 = vadd.f32 %v724, %v1399
  %v1401 = vpop.f32.mrb[0].mxu0
  %v1402 = vpop.f32.mrb[0].mxu0
  %v1403 = vadd.f32 %v724, %v1402
  %v1404 = vpop.f32.mrb[0].mxu0
  %1405 = vmatprep.mubr.bf16.mxu0 0
  %1406 = vmatmul.mubr.bf16.gmra.mrb[0].mxu0 %v1321
  %v1407 = vpop.f32.mrb[0].mxu0
  %v1408 = vadd.f32 %v724, %v1407
  %v1409 = vpop.f32.mrb[0].mxu0
  %v1410 = vpop.f32.mrb[0].mxu0
  %v1411 = vadd.f32 %v724, %v1410
  %v1412 = vpop.f32.mrb[0].mxu0
  %1413 = vmatprep.mubr.bf16.mxu0 0
  %1414 = vmatmul.mubr.bf16.gmra.mrb[0].mxu0 %v1324
  %v1415 = vpop.f32.mrb[0].mxu0
  %v1416 = vadd.f32 %v724, %v1415
  %v1417 = vpop.f32.mrb[0].mxu0
  %v1418 = vpop.f32.mrb[0].mxu0
  %v1419 = vadd.f32 %v724, %v1418
  %v1420 = vpop.f32.mrb[0].mxu0
  %1421 = vmatprep.mubr.bf16.mxu0 0
  %1422 = vmatmul.mubr.bf16.gmra.mrb[0].mxu0 %v1327
  %v1423 = vpop.f32.mrb[0].mxu0
  %v1424 = vadd.f32 %v724, %v1423
  %v1425 = vpop.f32.mrb[0].mxu0
  %v1426 = vpop.f32.mrb[0].mxu0
  %v1427 = vadd.f32 %v724, %v1426
  %v1428 = vpop.f32.mrb[0].mxu0
  %1429 = vmatprep.mubr.bf16.mxu0 0
  %1430 = vmatmul.mubr.bf16.gmra.mrb[0].mxu0 %v1330
  %v1431 = vpop.f32.mrb[0].mxu0
  %v1432 = vadd.f32 %v724, %v1431
  %v1433 = vpop.f32.mrb[0].mxu0
  %v1434 = vpop.f32.mrb[0].mxu0
  %v1435 = vadd.f32 %v724, %v1434
  %v1436 = vpop.f32.mrb[0].mxu0
  %1437 = vmatprep.mubr.bf16.mxu0 0
  %1438 = vmatmul.mubr.bf16.gmra.mrb[0].mxu0 %v1333
  %v1439 = vpop.f32.mrb[0].mxu0
  %v1440 = vadd.f32 %v724, %v1439
  %v1441 = vpop.f32.mrb[0].mxu0
  %v1442 = vpop.f32.mrb[0].mxu0
  %v1443 = vadd.f32 %v724, %v1442
  %v1444 = vpop.f32.mrb[0].mxu0
  %1445 = vmatprep.mubr.bf16.mxu0 0
  %1446 = vmatmul.mubr.bf16.gmra.mrb[0].mxu0 %v1336
  %v1447 = vpop.f32.mrb[0].mxu0
  %v1448 = vadd.f32 %v724, %v1447
  %v1449 = vpop.f32.mrb[0].mxu0
  %v1450 = vpop.f32.mrb[0].mxu0
  %v1451 = vadd.f32 %v724, %v1450
  %v1452 = vpop.f32.mrb[0].mxu0
  %1453 = vmatprep.mubr.bf16.mxu0 0
  %1454 = vmatmul.mubr.bf16.gmra.mrb[0].mxu0 %v1339
  %v1455 = vpop.f32.mrb[0].mxu0
  %v1456 = vadd.f32 %v724, %v1455
  %v1457 = vpop.f32.mrb[0].mxu0
  %v1458 = vpop.f32.mrb[0].mxu0
  %v1459 = vadd.f32 %v724, %v1458
  %v1460 = vpop.f32.mrb[0].mxu0
  %1461 = vmatprep.mubr.bf16.mxu0 0
  %1462 = vmatmul.mubr.bf16.gmra.mrb[0].mxu0 %v1342
  %v1463 = vpop.f32.mrb[0].mxu0
  %v1464 = vadd.f32 %v724, %v1463
  %v1465 = vpop.f32.mrb[0].mxu0
  %v1466 = vpop.f32.mrb[0].mxu0
  %v1467 = vadd.f32 %v724, %v1466
  %v1468 = vpop.f32.mrb[0].mxu0
  %1469 = vmatprep.mubr.bf16.mxu0 0
  %1470 = vmatmul.mubr.bf16.gmra.mrb[0].mxu0 %v1345
  %v1471 = vpop.f32.mrb[0].mxu0
  %v1472 = vadd.f32 %v724, %v1471
  %v1473 = vpop.f32.mrb[0].mxu0
  %v1474 = vpop.f32.mrb[0].mxu0
  %v1475 = vadd.f32 %v724, %v1474
  %v1476 = vpop.f32.mrb[0].mxu0
  %1477 = vmatprep.mubr.bf16.mxu0 0
  %1478 = vmatmul.mubr.bf16.gmra.mrb[0].mxu0 %v1348
  %v1479 = vpop.f32.mrb[0].mxu0
  %v1480 = vadd.f32 %v724, %v1479
  %v1481 = vpop.f32.mrb[0].mxu0
  %v1482 = vpop.f32.mrb[0].mxu0
  %v1483 = vadd.f32 %v724, %v1482
  %v1484 = vpop.f32.mrb[0].mxu0
  %1485 = vmatprep.mubr.bf16.mxu0 0
  %1486 = vmatmul.mubr.bf16.gmra.mrb[0].mxu0 %v1351
  %v1487 = vpop.f32.mrb[0].mxu0
  %v1488 = vadd.f32 %v724, %v1487
  %v1489 = vpop.f32.mrb[0].mxu0
  %v1490 = vpop.f32.mrb[0].mxu0
  %v1491 = vadd.f32 %v724, %v1490
  %v1492 = vpop.f32.mrb[0].mxu0
  %1493 = vmatprep.mubr.bf16.mxu0 0
  %1494 = vmatmul.mubr.bf16.gmra.mrb[0].mxu0 %v1354
  %v1495 = vpop.f32.mrb[0].mxu0
  %v1496 = vadd.f32 %v724, %v1495
  %v1497 = vpop.f32.mrb[0].mxu0
  %v1498 = vpop.f32.mrb[0].mxu0
  %v1499 = vadd.f32 %v724, %v1498
  %v1500 = vpop.f32.mrb[0].mxu0
  %1501 = vmatprep.mubr.bf16.mxu0 0
  %1502 = vmatmul.mubr.bf16.gmra.mrb[0].mxu0 %v1357
  %v1503 = vpop.f32.mrb[0].mxu0
  %v1504 = vadd.f32 %v724, %v1503
  %v1505 = vpop.f32.mrb[0].mxu0
  %v1506 = vpop.f32.mrb[0].mxu0
  %v1507 = vadd.f32 %v724, %v1506
  %v1508 = vpop.f32.mrb[0].mxu0
  %1509 = vmatprep.mubr.bf16.mxu0 0
  %1510 = vmatmul.mubr.bf16.gmra.mrb[0].mxu0 %v1360
  %v1511 = vpop.f32.mrb[0].mxu0
  %v1512 = vadd.f32 %v724, %v1511
  %v1513 = vpop.f32.mrb[0].mxu0
  %v1514 = vpop.f32.mrb[0].mxu0
  %v1515 = vadd.f32 %v724, %v1514
  %v1516 = vpop.f32.mrb[0].mxu0
  %1517 = vmatprep.mubr.bf16.mxu0 0
  %1518 = vmatmul.mubr.bf16.gmra.mrb[0].mxu0 %v1363
  %v1519 = vpop.f32.mrb[0].mxu0
  %v1520 = vadd.f32 %v724, %v1519
  %v1521 = vpop.f32.mrb[0].mxu0
  %v1522 = vpop.f32.mrb[0].mxu0
  %v1523 = vadd.f32 %v724, %v1522
  %v1524 = vpop.f32.mrb[0].mxu0
  %1525 = vdwg.mxu0
  %v1526 = vmul.f32 %v1400, 0.01
  %v1527 = vmul.f32 %v1403, 0.01
  %v1528 = vmul.f32 %v1408, 0.01
  %v1529 = vmul.f32 %v1411, 0.01
  %v1530 = vmul.f32 %v1416, 0.01
  %v1531 = vmul.f32 %v1419, 0.01
  %v1532 = vmul.f32 %v1424, 0.01
  %v1533 = vmul.f32 %v1427, 0.01
  %v1534 = vmul.f32 %v1432, 0.01
  %v1535 = vmul.f32 %v1435, 0.01
  %v1536 = vmul.f32 %v1440, 0.01
  %v1537 = vmul.f32 %v1443, 0.01
  %v1538 = vmul.f32 %v1448, 0.01
  %v1539 = vmul.f32 %v1451, 0.01
  %v1540 = vmul.f32 %v1456, 0.01
  %v1541 = vmul.f32 %v1459, 0.01
  %v1542 = vmul.f32 %v1464, 0.01
  %v1543 = vmul.f32 %v1467, 0.01
  %v1544 = vmul.f32 %v1472, 0.01
  %v1545 = vmul.f32 %v1475, 0.01
  %v1546 = vmul.f32 %v1480, 0.01
  %v1547 = vmul.f32 %v1483, 0.01
  %v1548 = vmul.f32 %v1488, 0.01
  %v1549 = vmul.f32 %v1491, 0.01
  %v1550 = vmul.f32 %v1496, 0.01
  %v1551 = vmul.f32 %v1499, 0.01
  %v1552 = vmul.f32 %v1504, 0.01
  %v1553 = vmul.f32 %v1507, 0.01
  %v1554 = vmul.f32 %v1512, 0.01
  %v1555 = vmul.f32 %v1515, 0.01
  %v1556 = vmul.f32 %v1520, 0.01
  %v1557 = vmul.f32 %v1523, 0.01
  %v1558 = vmax.f32 %v1400, %v1526
  %v1559 = vmax.f32 %v1403, %v1527
  %v1560 = vmax.f32 %v1408, %v1528
  %v1561 = vmax.f32 %v1411, %v1529
  %v1562 = vmax.f32 %v1416, %v1530
  %v1563 = vmax.f32 %v1419, %v1531
  %v1564 = vmax.f32 %v1424, %v1532
  %v1565 = vmax.f32 %v1427, %v1533
  %v1566 = vmax.f32 %v1432, %v1534
  %v1567 = vmax.f32 %v1435, %v1535
  %v1568 = vmax.f32 %v1440, %v1536
  %v1569 = vmax.f32 %v1443, %v1537
  %v1570 = vmax.f32 %v1448, %v1538
  %v1571 = vmax.f32 %v1451, %v1539
  %v1572 = vmax.f32 %v1456, %v1540
  %v1573 = vmax.f32 %v1459, %v1541
  %v1574 = vmax.f32 %v1464, %v1542
  %v1575 = vmax.f32 %v1467, %v1543
  %v1576 = vmax.f32 %v1472, %v1544
  %v1577 = vmax.f32 %v1475, %v1545
  %v1578 = vmax.f32 %v1480, %v1546
  %v1579 = vmax.f32 %v1483, %v1547
  %v1580 = vmax.f32 %v1488, %v1548
  %v1581 = vmax.f32 %v1491, %v1549
  %v1582 = vmax.f32 %v1496, %v1550
  %v1583 = vmax.f32 %v1499, %v1551
  %v1584 = vmax.f32 %v1504, %v1552
  %v1585 = vmax.f32 %v1507, %v1553
  %v1586 = vmax.f32 %v1512, %v1554
  %v1587 = vmax.f32 %v1515, %v1555
  %v1588 = vmax.f32 %v1520, %v1556
  %v1589 = vmax.f32 %v1523, %v1557
  %v1590 = vpack.c.bf16 %v1559, %v1558
  %v1591 = vpack.c.bf16 %v1561, %v1560
  %v1592 = vpack.c.bf16 %v1563, %v1562
  %v1593 = vpack.c.bf16 %v1565, %v1564
  %v1594 = vpack.c.bf16 %v1567, %v1566
  %v1595 = vpack.c.bf16 %v1569, %v1568
  %v1596 = vpack.c.bf16 %v1571, %v1570
  %v1597 = vpack.c.bf16 %v1573, %v1572
  %v1598 = vpack.c.bf16 %v1575, %v1574
  %v1599 = vpack.c.bf16 %v1577, %v1576
  %v1600 = vpack.c.bf16 %v1579, %v1578
  %v1601 = vpack.c.bf16 %v1581, %v1580
  %v1602 = vpack.c.bf16 %v1583, %v1582
  %v1603 = vpack.c.bf16 %v1585, %v1584
  %v1604 = vpack.c.bf16 %v1587, %v1586
  %v1605 = vpack.c.bf16 %v1589, %v1588
  %v1606 = vld [vmem:[%s7] sm:$0xf]
  %v1607 = vld [vmem:[%s7 + $0x4] sm:$0xf]
  %v1608 = vld [vmem:[%s7 + $0x8] sm:$0xf]
  %v1609 = vld [vmem:[%s7 + $0xc] sm:$0xf]
  %v1610 = vld [vmem:[%s8] sm:$0x1]
  %v1612 = vlaneseq
  %v1613 = vshrl.u32 %v1612, 7
  %v1614 = vsub.s32 0, %v1613
  %v1615 = vrot.slane %v1610, %v1614
  %v1621 = vunpack.c.l.b16 %v1606
  %v1622 = vunpack.c.l.b16 %v1607
  %v1623 = vunpack.c.l.b16 %v1608
  %v1624 = vunpack.c.l.b16 %v1609
  %v1625 = vpack.c.b16 %v1622, %v1621
  %v1626 = vpack.c.b16 %v1624, %v1623
  %v1630 = vsel %vm738, %v1590, 0
  %v1633 = vsel %vm738, %v1591, 0
  %v1636 = vsel %vm738, %v1592, 0
  %v1639 = vsel %vm738, %v1593, 0
  %v1642 = vsel %vm738, %v1594, 0
  %v1645 = vsel %vm738, %v1595, 0
  %v1648 = vsel %vm738, %v1596, 0
  %v1651 = vsel %vm738, %v1597, 0
  %v1654 = vsel %vm738, %v1598, 0
  %v1657 = vsel %vm738, %v1599, 0
  %v1660 = vsel %vm738, %v1600, 0
  %v1663 = vsel %vm738, %v1601, 0
  %v1666 = vsel %vm738, %v1602, 0
  %v1669 = vsel %vm738, %v1603, 0
  %v1672 = vsel %vm738, %v1604, 0
  %v1675 = vsel %vm738, %v1605, 0
  %1677 = vmatprep.subr.bf16.mxu0 0
  %1678 = vmatpush1.bf16.msra.mxu0 %v1625
  %1679 = vmatprep.subr.bf16.mxu0 0
  %1680 = vmatpush1.bf16.msra.mxu0 %v1626
  %1681 = vmatprep.subr.bf16.mxu0 0
  %1682 = vmatpush1.bf16.msra.mxu0 0
  %1683 = vmatprep.subr.bf16.mxu0 0
  %1684 = vmatpush1.bf16.msra.mxu0 0
  %1685 = vmatprep.subr.bf16.mxu0 0
  %1686 = vmatpush1.bf16.msra.mxu0 0
  %1687 = vmatprep.subr.bf16.mxu0 0
  %1688 = vmatpush1.bf16.msra.mxu0 0
  %1689 = vmatprep.subr.bf16.mxu0 0
  %1690 = vmatpush1.bf16.msra.mxu0 0
  %1691 = vmatprep.subr.bf16.mxu0 0
  %1692 = vmatpush1.bf16.msra.mxu0 0
  %1693 = vmatprep.subr.bf16.mxu0 0
  %1694 = vmatpush1.bf16.msra.mxu0 0
  %1695 = vmatprep.subr.bf16.mxu0 0
  %1696 = vmatpush1.bf16.msra.mxu0 0
  %1697 = vmatprep.subr.bf16.mxu0 0
  %1698 = vmatpush1.bf16.msra.mxu0 0
  %1699 = vmatprep.subr.bf16.mxu0 0
  %1700 = vmatpush1.bf16.msra.mxu0 0
  %1701 = vmatprep.subr.bf16.mxu0 0
  %1702 = vmatpush1.bf16.msra.mxu0 0
  %1703 = vmatprep.subr.bf16.mxu0 0
  %1704 = vmatpush1.bf16.msra.mxu0 0
  %1705 = vmatprep.subr.bf16.mxu0 0
  %1706 = vmatpush1.bf16.msra.mxu0 0
  %1707 = vmatprep.subr.bf16.mxu0 0
  %1708 = vmatpush1.bf16.msra.mxu0 0
  %1709 = vmatprep.mubr.bf16.mxu0 0
  %1710 = vmatmul.mubr.bf16.gmra.mrb[0].mxu0 %v1630
  %v1711 = vpop.f32.mrb[0].mxu0
  %v1712 = vadd.f32 %v1615, %v1711
  %v1713 = vpop.f32.mrb[0].mxu0
  %v1714 = vpop.f32.mrb[0].mxu0
  %v1715 = vadd.f32 %v1615, %v1714
  %v1716 = vpop.f32.mrb[0].mxu0
  %1717 = vmatprep.mubr.bf16.mxu0 0
  %1718 = vmatmul.mubr.bf16.gmra.mrb[0].mxu0 %v1633
  %v1719 = vpop.f32.mrb[0].mxu0
  %v1720 = vadd.f32 %v1615, %v1719
  %v1721 = vpop.f32.mrb[0].mxu0
  %v1722 = vpop.f32.mrb[0].mxu0
  %v1723 = vadd.f32 %v1615, %v1722
  %v1724 = vpop.f32.mrb[0].mxu0
  %1725 = vmatprep.mubr.bf16.mxu0 0
  %1726 = vmatmul.mubr.bf16.gmra.mrb[0].mxu0 %v1636
  %v1727 = vpop.f32.mrb[0].mxu0
  %v1728 = vadd.f32 %v1615, %v1727
  %v1729 = vpop.f32.mrb[0].mxu0
  %v1730 = vpop.f32.mrb[0].mxu0
  %v1731 = vadd.f32 %v1615, %v1730
  %v1732 = vpop.f32.mrb[0].mxu0
  %1733 = vmatprep.mubr.bf16.mxu0 0
  %1734 = vmatmul.mubr.bf16.gmra.mrb[0].mxu0 %v1639
  %v1735 = vpop.f32.mrb[0].mxu0
  %v1736 = vadd.f32 %v1615, %v1735
  %v1737 = vpop.f32.mrb[0].mxu0
  %v1738 = vpop.f32.mrb[0].mxu0
  %v1739 = vadd.f32 %v1615, %v1738
  %v1740 = vpop.f32.mrb[0].mxu0
  %1741 = vmatprep.mubr.bf16.mxu0 0
  %1742 = vmatmul.mubr.bf16.gmra.mrb[0].mxu0 %v1642
  %v1743 = vpop.f32.mrb[0].mxu0
  %v1744 = vadd.f32 %v1615, %v1743
  %v1745 = vpop.f32.mrb[0].mxu0
  %v1746 = vpop.f32.mrb[0].mxu0
  %v1747 = vadd.f32 %v1615, %v1746
  %v1748 = vpop.f32.mrb[0].mxu0
  %1749 = vmatprep.mubr.bf16.mxu0 0
  %1750 = vmatmul.mubr.bf16.gmra.mrb[0].mxu0 %v1645
  %v1751 = vpop.f32.mrb[0].mxu0
  %v1752 = vadd.f32 %v1615, %v1751
  %v1753 = vpop.f32.mrb[0].mxu0
  %v1754 = vpop.f32.mrb[0].mxu0
  %v1755 = vadd.f32 %v1615, %v1754
  %v1756 = vpop.f32.mrb[0].mxu0
  %1757 = vmatprep.mubr.bf16.mxu0 0
  %1758 = vmatmul.mubr.bf16.gmra.mrb[0].mxu0 %v1648
  %v1759 = vpop.f32.mrb[0].mxu0
  %v1760 = vadd.f32 %v1615, %v1759
  %v1761 = vpop.f32.mrb[0].mxu0
  %v1762 = vpop.f32.mrb[0].mxu0
  %v1763 = vadd.f32 %v1615, %v1762
  %v1764 = vpop.f32.mrb[0].mxu0
  %1765 = vmatprep.mubr.bf16.mxu0 0
  %1766 = vmatmul.mubr.bf16.gmra.mrb[0].mxu0 %v1651
  %v1767 = vpop.f32.mrb[0].mxu0
  %v1768 = vadd.f32 %v1615, %v1767
  %v1769 = vpop.f32.mrb[0].mxu0
  %v1770 = vpop.f32.mrb[0].mxu0
  %v1771 = vadd.f32 %v1615, %v1770
  %v1772 = vpop.f32.mrb[0].mxu0
  %1773 = vmatprep.mubr.bf16.mxu0 0
  %1774 = vmatmul.mubr.bf16.gmra.mrb[0].mxu0 %v1654
  %v1775 = vpop.f32.mrb[0].mxu0
  %v1776 = vadd.f32 %v1615, %v1775
  %v1777 = vpop.f32.mrb[0].mxu0
  %v1778 = vpop.f32.mrb[0].mxu0
  %v1779 = vadd.f32 %v1615, %v1778
  %v1780 = vpop.f32.mrb[0].mxu0
  %1781 = vmatprep.mubr.bf16.mxu0 0
  %1782 = vmatmul.mubr.bf16.gmra.mrb[0].mxu0 %v1657
  %v1783 = vpop.f32.mrb[0].mxu0
  %v1784 = vadd.f32 %v1615, %v1783
  %v1785 = vpop.f32.mrb[0].mxu0
  %v1786 = vpop.f32.mrb[0].mxu0
  %v1787 = vadd.f32 %v1615, %v1786
  %v1788 = vpop.f32.mrb[0].mxu0
  %1789 = vmatprep.mubr.bf16.mxu0 0
  %1790 = vmatmul.mubr.bf16.gmra.mrb[0].mxu0 %v1660
  %v1791 = vpop.f32.mrb[0].mxu0
  %v1792 = vadd.f32 %v1615, %v1791
  %v1793 = vpop.f32.mrb[0].mxu0
  %v1794 = vpop.f32.mrb[0].mxu0
  %v1795 = vadd.f32 %v1615, %v1794
  %v1796 = vpop.f32.mrb[0].mxu0
  %1797 = vmatprep.mubr.bf16.mxu0 0
  %1798 = vmatmul.mubr.bf16.gmra.mrb[0].mxu0 %v1663
  %v1799 = vpop.f32.mrb[0].mxu0
  %v1800 = vadd.f32 %v1615, %v1799
  %v1801 = vpop.f32.mrb[0].mxu0
  %v1802 = vpop.f32.mrb[0].mxu0
  %v1803 = vadd.f32 %v1615, %v1802
  %v1804 = vpop.f32.mrb[0].mxu0
  %1805 = vmatprep.mubr.bf16.mxu0 0
  %1806 = vmatmul.mubr.bf16.gmra.mrb[0].mxu0 %v1666
  %v1807 = vpop.f32.mrb[0].mxu0
  %v1808 = vadd.f32 %v1615, %v1807
  %v1809 = vpop.f32.mrb[0].mxu0
  %v1810 = vpop.f32.mrb[0].mxu0
  %v1811 = vadd.f32 %v1615, %v1810
  %v1812 = vpop.f32.mrb[0].mxu0
  %1813 = vmatprep.mubr.bf16.mxu0 0
  %1814 = vmatmul.mubr.bf16.gmra.mrb[0].mxu0 %v1669
  %v1815 = vpop.f32.mrb[0].mxu0
  %v1816 = vadd.f32 %v1615, %v1815
  %v1817 = vpop.f32.mrb[0].mxu0
  %v1818 = vpop.f32.mrb[0].mxu0
  %v1819 = vadd.f32 %v1615, %v1818
  %v1820 = vpop.f32.mrb[0].mxu0
  %1821 = vmatprep.mubr.bf16.mxu0 0
  %1822 = vmatmul.mubr.bf16.gmra.mrb[0].mxu0 %v1672
  %v1823 = vpop.f32.mrb[0].mxu0
  %v1824 = vadd.f32 %v1615, %v1823
  %v1825 = vpop.f32.mrb[0].mxu0
  %v1826 = vpop.f32.mrb[0].mxu0
  %v1827 = vadd.f32 %v1615, %v1826
  %v1828 = vpop.f32.mrb[0].mxu0
  %1829 = vmatprep.mubr.bf16.mxu0 0
  %1830 = vmatmul.mubr.bf16.gmra.mrb[0].mxu0 %v1675
  %v1831 = vpop.f32.mrb[0].mxu0
  %v1832 = vadd.f32 %v1615, %v1831
  %v1833 = vpop.f32.mrb[0].mxu0
  %v1834 = vpop.f32.mrb[0].mxu0
  %v1835 = vadd.f32 %v1615, %v1834
  %v1836 = vpop.f32.mrb[0].mxu0
  %1837 = vdwg.mxu0
  %vm1838 = vcmask 15360
  %1839 = vst.msk [vmem:[%s9] sm:$0xff] %vm1838, %v1712
  %1840 = vst.msk [vmem:[%s9 + $0x8] sm:$0xff] %vm1838, %v1715
  %1841 = vst.msk [vmem:[%s9 + $0x10] sm:$0xff] %vm1838, %v1720
  %1842 = vst.msk [vmem:[%s9 + $0x18] sm:$0xff] %vm1838, %v1723
  %1843 = vst.msk [vmem:[%s9 + $0x20] sm:$0xff] %vm1838, %v1728
  %1844 = vst.msk [vmem:[%s9 + $0x28] sm:$0xff] %vm1838, %v1731
  %1845 = vst.msk [vmem:[%s9 + $0x30] sm:$0xff] %vm1838, %v1736
  %1846 = vst.msk [vmem:[%s9 + $0x38] sm:$0xff] %vm1838, %v1739
  %1847 = vst.msk [vmem:[%s9 + $0x40] sm:$0xff] %vm1838, %v1744
  %1848 = vst.msk [vmem:[%s9 + $0x48] sm:$0xff] %vm1838, %v1747
  %1849 = vst.msk [vmem:[%s9 + $0x50] sm:$0xff] %vm1838, %v1752
  %1850 = vst.msk [vmem:[%s9 + $0x58] sm:$0xff] %vm1838, %v1755
  %1851 = vst.msk [vmem:[%s9 + $0x60] sm:$0xff] %vm1838, %v1760
  %1852 = vst.msk [vmem:[%s9 + $0x68] sm:$0xff] %vm1838, %v1763
  %1853 = vst.msk [vmem:[%s9 + $0x70] sm:$0xff] %vm1838, %v1768
  %1854 = vst.msk [vmem:[%s9 + $0x78] sm:$0xff] %vm1838, %v1771
  %1855 = vst.msk [vmem:[%s9 + $0x80] sm:$0xff] %vm1838, %v1776
  %1856 = vst.msk [vmem:[%s9 + $0x88] sm:$0xff] %vm1838, %v1779
  %1857 = vst.msk [vmem:[%s9 + $0x90] sm:$0xff] %vm1838, %v1784
  %1858 = vst.msk [vmem:[%s9 + $0x98] sm:$0xff] %vm1838, %v1787
  %1859 = vst.msk [vmem:[%s9 + $0xa0] sm:$0xff] %vm1838, %v1792
  %1860 = vst.msk [vmem:[%s9 + $0xa8] sm:$0xff] %vm1838, %v1795
  %1861 = vst.msk [vmem:[%s9 + $0xb0] sm:$0xff] %vm1838, %v1800
  %1862 = vst.msk [vmem:[%s9 + $0xb8] sm:$0xff] %vm1838, %v1803
  %1863 = vst.msk [vmem:[%s9 + $0xc0] sm:$0xff] %vm1838, %v1808
  %1864 = vst.msk [vmem:[%s9 + $0xc8] sm:$0xff] %vm1838, %v1811
  %1865 = vst.msk [vmem:[%s9 + $0xd0] sm:$0xff] %vm1838, %v1816
  %1866 = vst.msk [vmem:[%s9 + $0xd8] sm:$0xff] %vm1838, %v1819
  %1867 = vst.msk [vmem:[%s9 + $0xe0] sm:$0xff] %vm1838, %v1824
  %1868 = vst.msk [vmem:[%s9 + $0xe8] sm:$0xff] %vm1838, %v1827
  %1869 = vst.msk [vmem:[%s9 + $0xf0] sm:$0xff] %vm1838, %v1832
  %1870 = vst.msk [vmem:[%s9 + $0xf8] sm:$0xff] %vm1838, %v1835
  // Predicated region
  $region38: #{tpu_custom_call.1} parent=0 // pred_check
    _
  $region39: #{tpu_custom_call.1} parent=0 // pred_check_branch
    %1872 = sbr.rel (0) target = $region41
  $region40: #{tpu_custom_call.1} parent=0 // pred_region
    _
  $region41: #{tpu_custom_call.1} parent=0 // pred_fallthru
    _
  // Predicated region
  $region42: #{tpu_custom_call.1} parent=0 // pred_check
    _
  $region43: #{tpu_custom_call.1} parent=0 // pred_check_branch
    %1874 = sbr.rel (0) target = $region45
  $region44: #{tpu_custom_call.1} parent=0 // pred_region
    _
  $region45: #{tpu_custom_call.1} parent=0 // pred_fallthru
    _

</llo_original>
